<compile_context>
chip_gen: v7x
topology: tpu7x:2x2x1
jax: 0.10.0
libtpu: 0.0.40
codegen_flags: <defaults>
</compile_context>

<pallas_src>
import math
import jax
import jax.numpy as jnp
from jax.experimental import pallas as pl
from jax.experimental.pallas import tpu as pltpu

EPS = 1e-5


def gc_block_kernel(
    x_ref,                                        # (N, B*F)  input, x[b,n,f] -> [n, b*F+f]
    w1_ref, att1_ref, b1_ref, g1_ref, be1_ref,    # gc1 + bn1 params (pre-laid-out)
    w2_ref, att2_ref, b2_ref, g2_ref, be2_ref,    # gc2 + bn2 params (pre-laid-out)
    p_ref,                                        # (B*F, B*F) batch-mean operator
    out_ref,                                      # (N, B*F)
):
    x = x_ref[...]          # activation stays in vregs for the whole kernel
    p = p_ref[...]

    def gc_bn_tanh(a, w_blk, att, bias_row, gamma, beta):
        # Graph convolution: 2 lane-dense MXU matmuls.
        support = jnp.dot(a, w_blk, preferred_element_type=jnp.float32)
        y = jnp.dot(att, support, preferred_element_type=jnp.float32) + bias_row
        # BatchNorm1d over flattened (n*f) channels, biased stats over batch.
        # P = (1/B)*(ones(B,B) ⊗ I_F) -> mean over batch, already broadcast.
        mean = jnp.dot(y, p, preferred_element_type=jnp.float32)
        d = y - mean
        var = jnp.dot(d * d, p, preferred_element_type=jnp.float32)
        y = d * jax.lax.rsqrt(var + EPS) * gamma + beta
        # dropout: identity (see TODO above)
        return jnp.tanh(y)

    y = gc_bn_tanh(x, w1_ref[...], att1_ref[...], b1_ref[...], g1_ref[...], be1_ref[...])
    y = gc_bn_tanh(y, w2_ref[...], att2_ref[...], b2_ref[...], g2_ref[...], be2_ref[...])

    # residual
    out_ref[...] = y + x


def gc_block_forward(x, params):
    b, n, f = x.shape
    w1, att1, b1, g1, be1, w2, att2, b2, g2, be2 = params
    bf = b * f

    # ---- layout plumbing (outside the kernel) -------------------------------
    # activation layout: [node, batch*feat]
    x_lay = jnp.transpose(x, (1, 0, 2)).reshape(n, bf)
    # block-diagonal weights: (I_B ⊗ W) so the per-(b,n)-row x@W is one matmul
    eye_b = jnp.eye(b, dtype=jnp.float32)
    w1_blk = jnp.kron(eye_b, w1)                  # (B*F, B*F)
    w2_blk = jnp.kron(eye_b, w2)
    # batch-mean operator: (1/B) * (ones(B,B) ⊗ I_F)
    p_op = jnp.kron(jnp.full((b, b), 1.0 / b, jnp.float32), jnp.eye(f, jnp.float32.dtype and f, dtype=jnp.float32)) \
        if False else jnp.kron(jnp.full((b, b), 1.0 / b, jnp.float32), jnp.eye(f, dtype=jnp.float32))
    # GC bias (per f, broadcast over b & n) -> lane row of width B*F
    b1_row = jnp.tile(b1, b).reshape(1, bf)
    b2_row = jnp.tile(b2, b).reshape(1, bf)
    # BN gamma/beta (per n*f channel, broadcast over b) -> (N, B*F)
    g1_lay = jnp.tile(g1.reshape(n, f), (1, b))
    be1_lay = jnp.tile(be1.reshape(n, f), (1, b))
    g2_lay = jnp.tile(g2.reshape(n, f), (1, b))
    be2_lay = jnp.tile(be2.reshape(n, f), (1, b))

    args = (
        x_lay,
        w1_blk, att1, b1_row, g1_lay, be1_lay,
        w2_blk, att2, b2_row, g2_lay, be2_lay,
        p_op,
    )
    vmem = pl.BlockSpec(memory_space=pltpu.MemorySpace.VMEM)
    out_lay = pl.pallas_call(
        gc_block_kernel,
        out_shape=jax.ShapeDtypeStruct((n, bf), jnp.float32),
        in_specs=[vmem] * len(args),
        out_specs=vmem,
    )(*args)

    # back to (B, N, F)
    return jnp.transpose(out_lay.reshape(n, b, f), (1, 0, 2))


def gc_block_reference(x, params):
    """Pure-JAX reference mirroring the PyTorch forward (train-mode BN, no dropout)."""
    b, n, f = x.shape
    w1, att1, b1, g1, be1, w2, att2, b2, g2, be2 = params

    def gc(inp, w, att, bias):
        support = jnp.einsum("bnf,fg->bng", inp, w)
        return jnp.einsum("nm,bmg->bng", att, support) + bias

    def bn(inp, gamma, beta):
        flat = inp.reshape(b, -1)
        mean = flat.mean(axis=0)
        var = ((flat - mean) ** 2).mean(axis=0)
        out = (flat - mean) / jnp.sqrt(var + EPS) * gamma + beta
        return out.reshape(b, n, f)

    y = jnp.tanh(bn(gc(x, w1, att1, b1), g1, be1))
    y = jnp.tanh(bn(gc(y, w2, att2, b2), g2, be2))
    return y + x


def init_params(key, node_n, in_features):
    stdv = 1.0 / math.sqrt(in_features)
    ks = jax.random.split(key, 6)
    u = lambda k, shape: jax.random.uniform(
        k, shape, dtype=jnp.float32, minval=-stdv, maxval=stdv
    )
    w1 = u(ks[0], (in_features, in_features))
    att1 = u(ks[1], (node_n, node_n))
    b1 = u(ks[2], (in_features,))
    w2 = u(ks[3], (in_features, in_features))
    att2 = u(ks[4], (node_n, node_n))
    b2 = u(ks[5], (in_features,))
    # BatchNorm1d defaults: weight=1, bias=0
    g1 = jnp.ones((node_n * in_features,), jnp.float32)
    be1 = jnp.zeros((node_n * in_features,), jnp.float32)
    g2 = jnp.ones((node_n * in_features,), jnp.float32)
    be2 = jnp.zeros((node_n * in_features,), jnp.float32)
    return (w1, att1, b1, g1, be1, w2, att2, b2, g2, be2)


if __name__ == "__main__":
    B, NODE_N, IN_FEATURES = 8, 48, 32

    key = jax.random.PRNGKey(0)
    k_x, k_p = jax.random.split(key)
    x = jax.random.normal(k_x, (B, NODE_N, IN_FEATURES), dtype=jnp.float32)
    params = init_params(k_p, NODE_N, IN_FEATURES)

    out = gc_block_forward(x, params)
    out = jax.block_until_ready(out)

    ref = gc_block_reference(x, params)
    assert out.shape == (B, NODE_N, IN_FEATURES)
    assert jnp.allclose(out, ref, atol=1e-4, rtol=1e-4), "mismatch vs JAX reference"

    print("KERNEL_OK")
</pallas_src>

<mosaic_0001>
module attributes {stable_mosaic.version = 11 : i64} {
  func.func @gc_block_kernel(%arg0: memref<48x256xf32, #tpu.memory_space<vmem>>, %arg1: memref<256x256xf32, #tpu.memory_space<vmem>>, %arg2: memref<48x48xf32, #tpu.memory_space<vmem>>, %arg3: memref<1x256xf32, #tpu.memory_space<vmem>>, %arg4: memref<48x256xf32, #tpu.memory_space<vmem>>, %arg5: memref<48x256xf32, #tpu.memory_space<vmem>>, %arg6: memref<256x256xf32, #tpu.memory_space<vmem>>, %arg7: memref<48x48xf32, #tpu.memory_space<vmem>>, %arg8: memref<1x256xf32, #tpu.memory_space<vmem>>, %arg9: memref<48x256xf32, #tpu.memory_space<vmem>>, %arg10: memref<48x256xf32, #tpu.memory_space<vmem>>, %arg11: memref<256x256xf32, #tpu.memory_space<vmem>>, %arg12: memref<48x256xf32, #tpu.memory_space<vmem>>) attributes {dimension_semantics = [], scalar_prefetch = 0 : i64, scratch_operands = 0 : i64, tpu.core_type = #tpu.core_type<tc>} {
    %c0 = arith.constant 0 : index
    %c0_0 = arith.constant 0 : index
    %0 = vector.load %arg0[%c0, %c0_0] : memref<48x256xf32, #tpu.memory_space<vmem>>, vector<48x256xf32>
    %c0_1 = arith.constant 0 : index
    %c0_2 = arith.constant 0 : index
    %1 = vector.load %arg11[%c0_1, %c0_2] : memref<256x256xf32, #tpu.memory_space<vmem>>, vector<256x256xf32>
    %c0_3 = arith.constant 0 : index
    %c0_4 = arith.constant 0 : index
    %2 = vector.load %arg1[%c0_3, %c0_4] : memref<256x256xf32, #tpu.memory_space<vmem>>, vector<256x256xf32>
    %c0_5 = arith.constant 0 : index
    %c0_6 = arith.constant 0 : index
    %3 = vector.load %arg2[%c0_5, %c0_6] : memref<48x48xf32, #tpu.memory_space<vmem>>, vector<48x48xf32>
    %c0_7 = arith.constant 0 : index
    %c0_8 = arith.constant 0 : index
    %4 = vector.load %arg3[%c0_7, %c0_8] : memref<1x256xf32, #tpu.memory_space<vmem>>, vector<1x256xf32>
    %c0_9 = arith.constant 0 : index
    %c0_10 = arith.constant 0 : index
    %5 = vector.load %arg4[%c0_9, %c0_10] : memref<48x256xf32, #tpu.memory_space<vmem>>, vector<48x256xf32>
    %c0_11 = arith.constant 0 : index
    %c0_12 = arith.constant 0 : index
    %6 = vector.load %arg5[%c0_11, %c0_12] : memref<48x256xf32, #tpu.memory_space<vmem>>, vector<48x256xf32>
    %cst = arith.constant dense<0.000000e+00> : vector<48x256xf32>
    %7 = tpu.matmul %0, %2, %cst {dimension_numbers = #tpu.dot_dimension_numbers<[1], [0], [0], [1], [0, 0, 1, 1], [], []>} : vector<48x256xf32>, vector<256x256xf32>, vector<48x256xf32> -> vector<48x256xf32>
    %cst_13 = arith.constant dense<0.000000e+00> : vector<48x256xf32>
    %8 = tpu.matmul %3, %7, %cst_13 {dimension_numbers = #tpu.dot_dimension_numbers<[1], [0], [0], [1], [0, 0, 1, 1], [], []>} : vector<48x48xf32>, vector<48x256xf32>, vector<48x256xf32> -> vector<48x256xf32>
    %9 = vector.broadcast %4 : vector<1x256xf32> to vector<48x256xf32>
    %10 = arith.addf %8, %9 : vector<48x256xf32>
    %cst_14 = arith.constant dense<0.000000e+00> : vector<48x256xf32>
    %11 = tpu.matmul %10, %1, %cst_14 {dimension_numbers = #tpu.dot_dimension_numbers<[1], [0], [0], [1], [0, 0, 1, 1], [], []>} : vector<48x256xf32>, vector<256x256xf32>, vector<48x256xf32> -> vector<48x256xf32>
    %12 = arith.subf %10, %11 : vector<48x256xf32>
    %13 = arith.mulf %12, %12 : vector<48x256xf32>
    %cst_15 = arith.constant dense<0.000000e+00> : vector<48x256xf32>
    %14 = tpu.matmul %13, %1, %cst_15 {dimension_numbers = #tpu.dot_dimension_numbers<[1], [0], [0], [1], [0, 0, 1, 1], [], []>} : vector<48x256xf32>, vector<256x256xf32>, vector<48x256xf32> -> vector<48x256xf32>
    %cst_16 = arith.constant 9.99999974E-6 : f32
    %15 = vector.broadcast %cst_16 : f32 to vector<48x256xf32>
    %16 = arith.addf %14, %15 : vector<48x256xf32>
    %17 = math.rsqrt %16 : vector<48x256xf32>
    %18 = arith.mulf %12, %17 : vector<48x256xf32>
    %19 = arith.mulf %18, %5 : vector<48x256xf32>
    %20 = arith.addf %19, %6 : vector<48x256xf32>
    %21 = math.tanh %20 : vector<48x256xf32>
    %c0_17 = arith.constant 0 : index
    %c0_18 = arith.constant 0 : index
    %22 = vector.load %arg6[%c0_17, %c0_18] : memref<256x256xf32, #tpu.memory_space<vmem>>, vector<256x256xf32>
    %c0_19 = arith.constant 0 : index
    %c0_20 = arith.constant 0 : index
    %23 = vector.load %arg7[%c0_19, %c0_20] : memref<48x48xf32, #tpu.memory_space<vmem>>, vector<48x48xf32>
    %c0_21 = arith.constant 0 : index
    %c0_22 = arith.constant 0 : index
    %24 = vector.load %arg8[%c0_21, %c0_22] : memref<1x256xf32, #tpu.memory_space<vmem>>, vector<1x256xf32>
    %c0_23 = arith.constant 0 : index
    %c0_24 = arith.constant 0 : index
    %25 = vector.load %arg9[%c0_23, %c0_24] : memref<48x256xf32, #tpu.memory_space<vmem>>, vector<48x256xf32>
    %c0_25 = arith.constant 0 : index
    %c0_26 = arith.constant 0 : index
    %26 = vector.load %arg10[%c0_25, %c0_26] : memref<48x256xf32, #tpu.memory_space<vmem>>, vector<48x256xf32>
    %cst_27 = arith.constant dense<0.000000e+00> : vector<48x256xf32>
    %27 = tpu.matmul %21, %22, %cst_27 {dimension_numbers = #tpu.dot_dimension_numbers<[1], [0], [0], [1], [0, 0, 1, 1], [], []>} : vector<48x256xf32>, vector<256x256xf32>, vector<48x256xf32> -> vector<48x256xf32>
    %cst_28 = arith.constant dense<0.000000e+00> : vector<48x256xf32>
    %28 = tpu.matmul %23, %27, %cst_28 {dimension_numbers = #tpu.dot_dimension_numbers<[1], [0], [0], [1], [0, 0, 1, 1], [], []>} : vector<48x48xf32>, vector<48x256xf32>, vector<48x256xf32> -> vector<48x256xf32>
    %29 = vector.broadcast %24 : vector<1x256xf32> to vector<48x256xf32>
    %30 = arith.addf %28, %29 : vector<48x256xf32>
    %cst_29 = arith.constant dense<0.000000e+00> : vector<48x256xf32>
    %31 = tpu.matmul %30, %1, %cst_29 {dimension_numbers = #tpu.dot_dimension_numbers<[1], [0], [0], [1], [0, 0, 1, 1], [], []>} : vector<48x256xf32>, vector<256x256xf32>, vector<48x256xf32> -> vector<48x256xf32>
    %32 = arith.subf %30, %31 : vector<48x256xf32>
    %33 = arith.mulf %32, %32 : vector<48x256xf32>
    %cst_30 = arith.constant dense<0.000000e+00> : vector<48x256xf32>
    %34 = tpu.matmul %33, %1, %cst_30 {dimension_numbers = #tpu.dot_dimension_numbers<[1], [0], [0], [1], [0, 0, 1, 1], [], []>} : vector<48x256xf32>, vector<256x256xf32>, vector<48x256xf32> -> vector<48x256xf32>
    %cst_31 = arith.constant 9.99999974E-6 : f32
    %35 = vector.broadcast %cst_31 : f32 to vector<48x256xf32>
    %36 = arith.addf %34, %35 : vector<48x256xf32>
    %37 = math.rsqrt %36 : vector<48x256xf32>
    %38 = arith.mulf %32, %37 : vector<48x256xf32>
    %39 = arith.mulf %38, %25 : vector<48x256xf32>
    %40 = arith.addf %39, %26 : vector<48x256xf32>
    %41 = math.tanh %40 : vector<48x256xf32>
    %42 = arith.addf %41, %0 : vector<48x256xf32>
    %c0_32 = arith.constant 0 : index
    %c0_33 = arith.constant 0 : index
    %43 = vector.load %arg12[%c0_32, %c0_33] : memref<48x256xf32, #tpu.memory_space<vmem>>, vector<48x256xf32>
    tpu.vector_store %arg12[%c0_32, %c0_33], %42 {strides = array<i32>} : memref<48x256xf32, #tpu.memory_space<vmem>>, vector<48x256xf32>,
    return
  }
}

</mosaic_0001>

<llo_original>
// kernel: tpu_custom_call.1
$region0: #{tpu_custom_call.1}
  #allocation0 [shape = 'u32[]', space=smem, size = 0x4, offset = 0x4, fixed_abs, tag = 'smem constant byte address 0x4 - core index']
  #allocation1 [shape = 'u32[144,128]{1,0:T(1,128)}', space=vmem, size = 0x12000, scoped, tag = 'internal scratch']
  %s0 = inlined_call_operand.hbm [shape: f32[48,256], index: 0, kind: input, shape index: {}]
  %s1 = inlined_call_operand.hbm [shape: f32[256,256], index: 1, kind: input, shape index: {}]
  %s2 = inlined_call_operand.hbm [shape: f32[48,48], index: 2, kind: input, shape index: {}]
  %s3 = inlined_call_operand.vmem [shape: f32[1,256], index: 3, kind: input, shape index: {}]
  %s4 = inlined_call_operand.hbm [shape: f32[48,256], index: 4, kind: input, shape index: {}]
  %s5 = inlined_call_operand.hbm [shape: f32[48,256], index: 5, kind: input, shape index: {}]
  %s6 = inlined_call_operand.hbm [shape: f32[256,256], index: 6, kind: input, shape index: {}]
  %s7 = inlined_call_operand.hbm [shape: f32[48,48], index: 7, kind: input, shape index: {}]
  %s8 = inlined_call_operand.vmem [shape: f32[1,256], index: 8, kind: input, shape index: {}]
  %s9 = inlined_call_operand.hbm [shape: f32[48,256], index: 9, kind: input, shape index: {}]
  %s10 = inlined_call_operand.hbm [shape: f32[48,256], index: 10, kind: input, shape index: {}]
  %s11 = inlined_call_operand.hbm [shape: f32[256,256], index: 11, kind: input, shape index: {}]
  %s12 = inlined_call_operand.hbm [shape: f32[48,256], index: 12, kind: output, shape index: {}]
  %s13 = sld [smem:[#allocation0]]
  $region98: #{tpu_custom_call.1} parent=0
    _
  %s15 = ssub.s32 1, %s13
  %s16 = scalar_select 0, %s15, %s13
  $region1: #{tpu_custom_call.1} parent=0
    #allocation2 [shape = 'u8[49152]{0}', space=vmem, size = 0xc000, scoped, tag = 'input window, operand 0, single buffered']
    #allocation3 [shape = 's32[1]{0}', space=sflag, size = 0x4, scoped, tag = 'scoped memory for tpu_custom_call.1']
    #allocation4 [shape = 's32[1]{0}', space=sflag, size = 0x4, scoped, tag = 'scoped memory for tpu_custom_call.1']
    #allocation5 [shape = 'u8[262144]{0}', space=vmem, size = 0x40000, scoped, tag = 'input window, operand 1, single buffered']
    #allocation6 [shape = 's32[1]{0}', space=sflag, size = 0x4, scoped, tag = 'scoped memory for tpu_custom_call.1']
    #allocation7 [shape = 'u8[24576]{0}', space=vmem, size = 0x6000, scoped, tag = 'input window, operand 2, single buffered']
    #allocation8 [shape = 'u8[49152]{0}', space=vmem, size = 0xc000, scoped, tag = 'input window, operand 4, single buffered']
    #allocation9 [shape = 's32[1]{0}', space=sflag, size = 0x4, scoped, tag = 'scoped memory for tpu_custom_call.1']
    #allocation10 [shape = 'u8[49152]{0}', space=vmem, size = 0xc000, scoped, tag = 'input window, operand 5, single buffered']
    #allocation11 [shape = 'u8[262144]{0}', space=vmem, size = 0x40000, scoped, tag = 'input window, operand 6, single buffered']
    #allocation12 [shape = 's32[1]{0}', space=sflag, size = 0x4, scoped, tag = 'scoped memory for tpu_custom_call.1']
    #allocation13 [shape = 'u8[24576]{0}', space=vmem, size = 0x6000, scoped, tag = 'input window, operand 7, single buffered']
    #allocation14 [shape = 'u8[49152]{0}', space=vmem, size = 0xc000, scoped, tag = 'input window, operand 9, single buffered']
    #allocation15 [shape = 's32[1]{0}', space=sflag, size = 0x4, scoped, tag = 'scoped memory for tpu_custom_call.1']
    #allocation16 [shape = 'u8[49152]{0}', space=vmem, size = 0xc000, scoped, tag = 'input window, operand 10, single buffered']
    #allocation17 [shape = 'u8[262144]{0}', space=vmem, size = 0x40000, scoped, tag = 'input window, operand 11, single buffered']
    #allocation18 [shape = 's32[1]{0}', space=sflag, size = 0x4, scoped, tag = 'scoped memory for tpu_custom_call.1']
    #allocation19 [shape = 'u8[49152]{0}', space=vmem, size = 0xc000, scoped, tag = 'output window, operand 0, single buffered']
    %17 = vsyncpa [#allocation3], 0
    %18 = vsyncpa [#allocation6], 0
    %19 = vsyncpa [#allocation9], 0
    %20 = vsyncpa [#allocation12], 0
    %21 = vsyncpa [#allocation15], 0
    %22 = vsyncpa [#allocation18], 0
    %23 = vsyncpa [#allocation4], 0
    // Predicated region
    $region2: #{tpu_custom_call.1} parent=1 // pred_check
      _
    $region3: #{tpu_custom_call.1} parent=1 // pred_check_branch
      %25 = sbr.rel (0) target = $region5
    $region4: #{tpu_custom_call.1} parent=1 // pred_region
      %s27 = ssub.s32 1536, 1536
      %28 = vsyncadd [#allocation3], %s27
      %s29 = sshll.u32 [#allocation2], 4
      %s30 = int_to_ptr.vmem [resolvable:$true] %s29
      %35 = dma.hbm_to_vmem [thread:$0]  %s0, 1536, %s30, [#allocation3], 256, 256, 16
    $region5: #{tpu_custom_call.1} parent=1 // pred_fallthru
      _
    // Predicated region
    $region6: #{tpu_custom_call.1} parent=1 // pred_check
      _
    $region7: #{tpu_custom_call.1} parent=1 // pred_check_branch
      %37 = sbr.rel (0) target = $region9
    $region8: #{tpu_custom_call.1} parent=1 // pred_region
      %s39 = ssub.s32 8192, 8192
      %40 = vsyncadd [#allocation6], %s39
      %s41 = sshll.u32 [#allocation5], 4
      %s42 = int_to_ptr.vmem [resolvable:$true] %s41
      %47 = dma.hbm_to_vmem [thread:$0]  %s1, 8192, %s42, [#allocation6], 256, 256, 16
    $region9: #{tpu_custom_call.1} parent=1 // pred_fallthru
      _
    // Predicated region
    $region10: #{tpu_custom_call.1} parent=1 // pred_check
      _
    $region11: #{tpu_custom_call.1} parent=1 // pred_check_branch
      %49 = sbr.rel (0) target = $region13
    $region12: #{tpu_custom_call.1} parent=1 // pred_region
      %s51 = ssub.s32 768, 768
      %52 = vsyncadd [#allocation6], %s51
      %s53 = sshll.u32 [#allocation7], 4
      %s54 = int_to_ptr.vmem [resolvable:$true] %s53
      %59 = dma.hbm_to_vmem [thread:$0]  %s2, 768, %s54, [#allocation6], 128, 128, 8
    $region13: #{tpu_custom_call.1} parent=1 // pred_fallthru
      _
    // Predicated region
    $region14: #{tpu_custom_call.1} parent=1 // pred_check
      _
    $region15: #{tpu_custom_call.1} parent=1 // pred_check_branch
      %61 = sbr.rel (0) target = $region17
    $region16: #{tpu_custom_call.1} parent=1 // pred_region
      _
    $region17: #{tpu_custom_call.1} parent=1 // pred_fallthru
      _
    // Predicated region
    $region18: #{tpu_custom_call.1} parent=1 // pred_check
      _
    $region19: #{tpu_custom_call.1} parent=1 // pred_check_branch
      %63 = sbr.rel (0) target = $region21
    $region20: #{tpu_custom_call.1} parent=1 // pred_region
      %s65 = ssub.s32 1536, 1536
      %66 = vsyncadd [#allocation9], %s65
      %s67 = sshll.u32 [#allocation8], 4
      %s68 = int_to_ptr.vmem [resolvable:$true] %s67
      %73 = dma.hbm_to_vmem [thread:$0]  %s4, 1536, %s68, [#allocation9], 256, 256, 16
    $region21: #{tpu_custom_call.1} parent=1 // pred_fallthru
      _
    // Predicated region
    $region22: #{tpu_custom_call.1} parent=1 // pred_check
      _
    $region23: #{tpu_custom_call.1} parent=1 // pred_check_branch
      %75 = sbr.rel (0) target = $region25
    $region24: #{tpu_custom_call.1} parent=1 // pred_region
      %s77 = ssub.s32 1536, 1536
      %78 = vsyncadd [#allocation9], %s77
      %s79 = sshll.u32 [#allocation10], 4
      %s80 = int_to_ptr.vmem [resolvable:$true] %s79
      %85 = dma.hbm_to_vmem [thread:$0]  %s5, 1536, %s80, [#allocation9], 256, 256, 16
    $region25: #{tpu_custom_call.1} parent=1 // pred_fallthru
      _
    // Predicated region
    $region26: #{tpu_custom_call.1} parent=1 // pred_check
      _
    $region27: #{tpu_custom_call.1} parent=1 // pred_check_branch
      %87 = sbr.rel (0) target = $region29
    $region28: #{tpu_custom_call.1} parent=1 // pred_region
      %s89 = ssub.s32 8192, 8192
      %90 = vsyncadd [#allocation12], %s89
      %s91 = sshll.u32 [#allocation11], 4
      %s92 = int_to_ptr.vmem [resolvable:$true] %s91
      %97 = dma.hbm_to_vmem [thread:$0]  %s6, 8192, %s92, [#allocation12], 256, 256, 16
    $region29: #{tpu_custom_call.1} parent=1 // pred_fallthru
      _
    // Predicated region
    $region30: #{tpu_custom_call.1} parent=1 // pred_check
      _
    $region31: #{tpu_custom_call.1} parent=1 // pred_check_branch
      %99 = sbr.rel (0) target = $region33
    $region32: #{tpu_custom_call.1} parent=1 // pred_region
      %s101 = ssub.s32 768, 768
      %102 = vsyncadd [#allocation12], %s101
      %s103 = sshll.u32 [#allocation13], 4
      %s104 = int_to_ptr.vmem [resolvable:$true] %s103
      %109 = dma.hbm_to_vmem [thread:$0]  %s7, 768, %s104, [#allocation12], 128, 128, 8
    $region33: #{tpu_custom_call.1} parent=1 // pred_fallthru
      _
    // Predicated region
    $region34: #{tpu_custom_call.1} parent=1 // pred_check
      _
    $region35: #{tpu_custom_call.1} parent=1 // pred_check_branch
      %111 = sbr.rel (0) target = $region37
    $region36: #{tpu_custom_call.1} parent=1 // pred_region
      _
    $region37: #{tpu_custom_call.1} parent=1 // pred_fallthru
      _
    // Predicated region
    $region38: #{tpu_custom_call.1} parent=1 // pred_check
      _
    $region39: #{tpu_custom_call.1} parent=1 // pred_check_branch
      %113 = sbr.rel (0) target = $region41
    $region40: #{tpu_custom_call.1} parent=1 // pred_region
      %s115 = ssub.s32 1536, 1536
      %116 = vsyncadd [#allocation15], %s115
      %s117 = sshll.u32 [#allocation14], 4
      %s118 = int_to_ptr.vmem [resolvable:$true] %s117
      %123 = dma.hbm_to_vmem [thread:$0]  %s9, 1536, %s118, [#allocation15], 256, 256, 16
    $region41: #{tpu_custom_call.1} parent=1 // pred_fallthru
      _
    // Predicated region
    $region42: #{tpu_custom_call.1} parent=1 // pred_check
      _
    $region43: #{tpu_custom_call.1} parent=1 // pred_check_branch
      %125 = sbr.rel (0) target = $region45
    $region44: #{tpu_custom_call.1} parent=1 // pred_region
      %s127 = ssub.s32 1536, 1536
      %128 = vsyncadd [#allocation15], %s127
      %s129 = sshll.u32 [#allocation16], 4
      %s130 = int_to_ptr.vmem [resolvable:$true] %s129
      %135 = dma.hbm_to_vmem [thread:$0]  %s10, 1536, %s130, [#allocation15], 256, 256, 16
    $region45: #{tpu_custom_call.1} parent=1 // pred_fallthru
      _
    // Predicated region
    $region46: #{tpu_custom_call.1} parent=1 // pred_check
      _
    $region47: #{tpu_custom_call.1} parent=1 // pred_check_branch
      %137 = sbr.rel (0) target = $region49
    $region48: #{tpu_custom_call.1} parent=1 // pred_region
      %s139 = ssub.s32 8192, 8192
      %140 = vsyncadd [#allocation18], %s139
      %s141 = sshll.u32 [#allocation17], 4
      %s142 = int_to_ptr.vmem [resolvable:$true] %s141
      %147 = dma.hbm_to_vmem [thread:$0]  %s11, 8192, %s142, [#allocation18], 256, 256, 16
    $region49: #{tpu_custom_call.1} parent=1 // pred_fallthru
      _
    // Predicated region
    $region50: #{tpu_custom_call.1} parent=1 // pred_check
      _
    $region51: #{tpu_custom_call.1} parent=1 // pred_check_branch
      %149 = sbr.rel (0) target = $region53
    $region52: #{tpu_custom_call.1} parent=1 // pred_region
      %150 = dma.done [#allocation3], 1536
    $region53: #{tpu_custom_call.1} parent=1 // pred_fallthru
      _
    // Predicated region
    $region54: #{tpu_custom_call.1} parent=1 // pred_check
      _
    $region55: #{tpu_custom_call.1} parent=1 // pred_check_branch
      %152 = sbr.rel (0) target = $region57
    $region56: #{tpu_custom_call.1} parent=1 // pred_region
      %153 = dma.done [#allocation6], 8192
    $region57: #{tpu_custom_call.1} parent=1 // pred_fallthru
      _
    // Predicated region
    $region58: #{tpu_custom_call.1} parent=1 // pred_check
      _
    $region59: #{tpu_custom_call.1} parent=1 // pred_check_branch
      %155 = sbr.rel (0) target = $region61
    $region60: #{tpu_custom_call.1} parent=1 // pred_region
      %156 = dma.done [#allocation6], 768
    $region61: #{tpu_custom_call.1} parent=1 // pred_fallthru
      _
    // Predicated region
    $region62: #{tpu_custom_call.1} parent=1 // pred_check
      _
    $region63: #{tpu_custom_call.1} parent=1 // pred_check_branch
      %158 = sbr.rel (0) target = $region65
    $region64: #{tpu_custom_call.1} parent=1 // pred_region
      %159 = dma.done [#allocation9], 1536
    $region65: #{tpu_custom_call.1} parent=1 // pred_fallthru
      _
    // Predicated region
    $region66: #{tpu_custom_call.1} parent=1 // pred_check
      _
    $region67: #{tpu_custom_call.1} parent=1 // pred_check_branch
      %161 = sbr.rel (0) target = $region69
    $region68: #{tpu_custom_call.1} parent=1 // pred_region
      %162 = dma.done [#allocation9], 1536
    $region69: #{tpu_custom_call.1} parent=1 // pred_fallthru
      _
    // Predicated region
    $region70: #{tpu_custom_call.1} parent=1 // pred_check
      _
    $region71: #{tpu_custom_call.1} parent=1 // pred_check_branch
      %164 = sbr.rel (0) target = $region73
    $region72: #{tpu_custom_call.1} parent=1 // pred_region
      %165 = dma.done [#allocation12], 8192
    $region73: #{tpu_custom_call.1} parent=1 // pred_fallthru
      _
    // Predicated region
    $region74: #{tpu_custom_call.1} parent=1 // pred_check
      _
    $region75: #{tpu_custom_call.1} parent=1 // pred_check_branch
      %167 = sbr.rel (0) target = $region77
    $region76: #{tpu_custom_call.1} parent=1 // pred_region
      %168 = dma.done [#allocation12], 768
    $region77: #{tpu_custom_call.1} parent=1 // pred_fallthru
      _
    // Predicated region
    $region78: #{tpu_custom_call.1} parent=1 // pred_check
      _
    $region79: #{tpu_custom_call.1} parent=1 // pred_check_branch
      %170 = sbr.rel (0) target = $region81
    $region80: #{tpu_custom_call.1} parent=1 // pred_region
      %171 = dma.done [#allocation15], 1536
    $region81: #{tpu_custom_call.1} parent=1 // pred_fallthru
      _
    // Predicated region
    $region82: #{tpu_custom_call.1} parent=1 // pred_check
      _
    $region83: #{tpu_custom_call.1} parent=1 // pred_check_branch
      %173 = sbr.rel (0) target = $region85
    $region84: #{tpu_custom_call.1} parent=1 // pred_region
      %174 = dma.done [#allocation15], 1536
    $region85: #{tpu_custom_call.1} parent=1 // pred_fallthru
      _
    // Predicated region
    $region86: #{tpu_custom_call.1} parent=1 // pred_check
      _
    $region87: #{tpu_custom_call.1} parent=1 // pred_check_branch
      %176 = sbr.rel (0) target = $region89
    $region88: #{tpu_custom_call.1} parent=1 // pred_region
      %177 = dma.done [#allocation18], 8192
    $region89: #{tpu_custom_call.1} parent=1 // pred_fallthru
      _
    %v178 = vld [vmem:[#allocation2] sm:$0xff]
    %v179 = vld [vmem:[#allocation2 + $0x8] sm:$0xff]
    %v180 = vld [vmem:[#allocation2 + $0x10] sm:$0xff]
    %v181 = vld [vmem:[#allocation2 + $0x18] sm:$0xff]
    %v182 = vld [vmem:[#allocation2 + $0x20] sm:$0xff]
    %v183 = vld [vmem:[#allocation2 + $0x28] sm:$0xff]
    %v184 = vld [vmem:[#allocation2 + $0x30] sm:$0xff]
    %v185 = vld [vmem:[#allocation2 + $0x38] sm:$0xff]
    %v186 = vld [vmem:[#allocation2 + $0x40] sm:$0xff]
    %v187 = vld [vmem:[#allocation2 + $0x48] sm:$0xff]
    %v188 = vld [vmem:[#allocation2 + $0x50] sm:$0xff]
    %v189 = vld [vmem:[#allocation2 + $0x58] sm:$0xff]
    %v190 = vld [vmem:[#allocation17] sm:$0xff]
    %v191 = vld [vmem:[#allocation17 + $0x8] sm:$0xff]
    %v192 = vld [vmem:[#allocation17 + $0x10] sm:$0xff]
    %v193 = vld [vmem:[#allocation17 + $0x18] sm:$0xff]
    %v194 = vld [vmem:[#allocation17 + $0x20] sm:$0xff]
    %v195 = vld [vmem:[#allocation17 + $0x28] sm:$0xff]
    %v196 = vld [vmem:[#allocation17 + $0x30] sm:$0xff]
    %v197 = vld [vmem:[#allocation17 + $0x38] sm:$0xff]
    %v198 = vld [vmem:[#allocation17 + $0x40] sm:$0xff]
    %v199 = vld [vmem:[#allocation17 + $0x48] sm:$0xff]
    %v200 = vld [vmem:[#allocation17 + $0x50] sm:$0xff]
    %v201 = vld [vmem:[#allocation17 + $0x58] sm:$0xff]
    %v202 = vld [vmem:[#allocation17 + $0x60] sm:$0xff]
    %v203 = vld [vmem:[#allocation17 + $0x68] sm:$0xff]
    %v204 = vld [vmem:[#allocation17 + $0x70] sm:$0xff]
    %v205 = vld [vmem:[#allocation17 + $0x78] sm:$0xff]
    %v206 = vld [vmem:[#allocation17 + $0x80] sm:$0xff]
    %v207 = vld [vmem:[#allocation17 + $0x88] sm:$0xff]
    %v208 = vld [vmem:[#allocation17 + $0x90] sm:$0xff]
    %v209 = vld [vmem:[#allocation17 + $0x98] sm:$0xff]
    %v210 = vld [vmem:[#allocation17 + $0xa0] sm:$0xff]
    %v211 = vld [vmem:[#allocation17 + $0xa8] sm:$0xff]
    %v212 = vld [vmem:[#allocation17 + $0xb0] sm:$0xff]
    %v213 = vld [vmem:[#allocation17 + $0xb8] sm:$0xff]
    %v214 = vld [vmem:[#allocation17 + $0xc0] sm:$0xff]
    %v215 = vld [vmem:[#allocation17 + $0xc8] sm:$0xff]
    %v216 = vld [vmem:[#allocation17 + $0xd0] sm:$0xff]
    %v217 = vld [vmem:[#allocation17 + $0xd8] sm:$0xff]
    %v218 = vld [vmem:[#allocation17 + $0xe0] sm:$0xff]
    %v219 = vld [vmem:[#allocation17 + $0xe8] sm:$0xff]
    %v220 = vld [vmem:[#allocation17 + $0xf0] sm:$0xff]
    %v221 = vld [vmem:[#allocation17 + $0xf8] sm:$0xff]
    %v222 = vld [vmem:[#allocation17 + $0x100] sm:$0xff]
    %v223 = vld [vmem:[#allocation17 + $0x108] sm:$0xff]
    %v224 = vld [vmem:[#allocation17 + $0x110] sm:$0xff]
    %v225 = vld [vmem:[#allocation17 + $0x118] sm:$0xff]
    %v226 = vld [vmem:[#allocation17 + $0x120] sm:$0xff]
    %v227 = vld [vmem:[#allocation17 + $0x128] sm:$0xff]
    %v228 = vld [vmem:[#allocation17 + $0x130] sm:$0xff]
    %v229 = vld [vmem:[#allocation17 + $0x138] sm:$0xff]
    %v230 = vld [vmem:[#allocation17 + $0x140] sm:$0xff]
    %v231 = vld [vmem:[#allocation17 + $0x148] sm:$0xff]
    %v232 = vld [vmem:[#allocation17 + $0x150] sm:$0xff]
    %v233 = vld [vmem:[#allocation17 + $0x158] sm:$0xff]
    %v234 = vld [vmem:[#allocation17 + $0x160] sm:$0xff]
    %v235 = vld [vmem:[#allocation17 + $0x168] sm:$0xff]
    %v236 = vld [vmem:[#allocation17 + $0x170] sm:$0xff]
    %v237 = vld [vmem:[#allocation17 + $0x178] sm:$0xff]
    %v238 = vld [vmem:[#allocation17 + $0x180] sm:$0xff]
    %v239 = vld [vmem:[#allocation17 + $0x188] sm:$0xff]
    %v240 = vld [vmem:[#allocation17 + $0x190] sm:$0xff]
    %v241 = vld [vmem:[#allocation17 + $0x198] sm:$0xff]
    %v242 = vld [vmem:[#allocation17 + $0x1a0] sm:$0xff]
    %v243 = vld [vmem:[#allocation17 + $0x1a8] sm:$0xff]
    %v244 = vld [vmem:[#allocation17 + $0x1b0] sm:$0xff]
    %v245 = vld [vmem:[#allocation17 + $0x1b8] sm:$0xff]
    %v246 = vld [vmem:[#allocation17 + $0x1c0] sm:$0xff]
    %v247 = vld [vmem:[#allocation17 + $0x1c8] sm:$0xff]
    %v248 = vld [vmem:[#allocation17 + $0x1d0] sm:$0xff]
    %v249 = vld [vmem:[#allocation17 + $0x1d8] sm:$0xff]
    %v250 = vld [vmem:[#allocation17 + $0x1e0] sm:$0xff]
    %v251 = vld [vmem:[#allocation17 + $0x1e8] sm:$0xff]
    %v252 = vld [vmem:[#allocation17 + $0x1f0] sm:$0xff]
    %v253 = vld [vmem:[#allocation17 + $0x1f8] sm:$0xff]
    %v254 = vld [vmem:[#allocation5] sm:$0xff]
    %v255 = vld [vmem:[#allocation5 + $0x8] sm:$0xff]
    %v256 = vld [vmem:[#allocation5 + $0x10] sm:$0xff]
    %v257 = vld [vmem:[#allocation5 + $0x18] sm:$0xff]
    %v258 = vld [vmem:[#allocation5 + $0x20] sm:$0xff]
    %v259 = vld [vmem:[#allocation5 + $0x28] sm:$0xff]
    %v260 = vld [vmem:[#allocation5 + $0x30] sm:$0xff]
    %v261 = vld [vmem:[#allocation5 + $0x38] sm:$0xff]
    %v262 = vld [vmem:[#allocation5 + $0x40] sm:$0xff]
    %v263 = vld [vmem:[#allocation5 + $0x48] sm:$0xff]
    %v264 = vld [vmem:[#allocation5 + $0x50] sm:$0xff]
    %v265 = vld [vmem:[#allocation5 + $0x58] sm:$0xff]
    %v266 = vld [vmem:[#allocation5 + $0x60] sm:$0xff]
    %v267 = vld [vmem:[#allocation5 + $0x68] sm:$0xff]
    %v268 = vld [vmem:[#allocation5 + $0x70] sm:$0xff]
    %v269 = vld [vmem:[#allocation5 + $0x78] sm:$0xff]
    %v270 = vld [vmem:[#allocation5 + $0x80] sm:$0xff]
    %v271 = vld [vmem:[#allocation5 + $0x88] sm:$0xff]
    %v272 = vld [vmem:[#allocation5 + $0x90] sm:$0xff]
    %v273 = vld [vmem:[#allocation5 + $0x98] sm:$0xff]
    %v274 = vld [vmem:[#allocation5 + $0xa0] sm:$0xff]
    %v275 = vld [vmem:[#allocation5 + $0xa8] sm:$0xff]
    %v276 = vld [vmem:[#allocation5 + $0xb0] sm:$0xff]
    %v277 = vld [vmem:[#allocation5 + $0xb8] sm:$0xff]
    %v278 = vld [vmem:[#allocation5 + $0xc0] sm:$0xff]
    %v279 = vld [vmem:[#allocation5 + $0xc8] sm:$0xff]
    %v280 = vld [vmem:[#allocation5 + $0xd0] sm:$0xff]
    %v281 = vld [vmem:[#allocation5 + $0xd8] sm:$0xff]
    %v282 = vld [vmem:[#allocation5 + $0xe0] sm:$0xff]
    %v283 = vld [vmem:[#allocation5 + $0xe8] sm:$0xff]
    %v284 = vld [vmem:[#allocation5 + $0xf0] sm:$0xff]
    %v285 = vld [vmem:[#allocation5 + $0xf8] sm:$0xff]
    %v286 = vld [vmem:[#allocation5 + $0x100] sm:$0xff]
    %v287 = vld [vmem:[#allocation5 + $0x108] sm:$0xff]
    %v288 = vld [vmem:[#allocation5 + $0x110] sm:$0xff]
    %v289 = vld [vmem:[#allocation5 + $0x118] sm:$0xff]
    %v290 = vld [vmem:[#allocation5 + $0x120] sm:$0xff]
    %v291 = vld [vmem:[#allocation5 + $0x128] sm:$0xff]
    %v292 = vld [vmem:[#allocation5 + $0x130] sm:$0xff]
    %v293 = vld [vmem:[#allocation5 + $0x138] sm:$0xff]
    %v294 = vld [vmem:[#allocation5 + $0x140] sm:$0xff]
    %v295 = vld [vmem:[#allocation5 + $0x148] sm:$0xff]
    %v296 = vld [vmem:[#allocation5 + $0x150] sm:$0xff]
    %v297 = vld [vmem:[#allocation5 + $0x158] sm:$0xff]
    %v298 = vld [vmem:[#allocation5 + $0x160] sm:$0xff]
    %v299 = vld [vmem:[#allocation5 + $0x168] sm:$0xff]
    %v300 = vld [vmem:[#allocation5 + $0x170] sm:$0xff]
    %v301 = vld [vmem:[#allocation5 + $0x178] sm:$0xff]
    %v302 = vld [vmem:[#allocation5 + $0x180] sm:$0xff]
    %v303 = vld [vmem:[#allocation5 + $0x188] sm:$0xff]
    %v304 = vld [vmem:[#allocation5 + $0x190] sm:$0xff]
    %v305 = vld [vmem:[#allocation5 + $0x198] sm:$0xff]
    %v306 = vld [vmem:[#allocation5 + $0x1a0] sm:$0xff]
    %v307 = vld [vmem:[#allocation5 + $0x1a8] sm:$0xff]
    %v308 = vld [vmem:[#allocation5 + $0x1b0] sm:$0xff]
    %v309 = vld [vmem:[#allocation5 + $0x1b8] sm:$0xff]
    %v310 = vld [vmem:[#allocation5 + $0x1c0] sm:$0xff]
    %v311 = vld [vmem:[#allocation5 + $0x1c8] sm:$0xff]
    %v312 = vld [vmem:[#allocation5 + $0x1d0] sm:$0xff]
    %v313 = vld [vmem:[#allocation5 + $0x1d8] sm:$0xff]
    %v314 = vld [vmem:[#allocation5 + $0x1e0] sm:$0xff]
    %v315 = vld [vmem:[#allocation5 + $0x1e8] sm:$0xff]
    %v316 = vld [vmem:[#allocation5 + $0x1f0] sm:$0xff]
    %v317 = vld [vmem:[#allocation5 + $0x1f8] sm:$0xff]
    %v318 = vld [vmem:[#allocation7] sm:$0xff]
    %v319 = vld [vmem:[#allocation7 + $0x8] sm:$0xff]
    %v320 = vld [vmem:[#allocation7 + $0x10] sm:$0xff]
    %v321 = vld [vmem:[#allocation7 + $0x18] sm:$0xff]
    %v322 = vld [vmem:[#allocation7 + $0x20] sm:$0xff]
    %v323 = vld [vmem:[#allocation7 + $0x28] sm:$0xff]
    %v324 = vld [vmem:[%s3] sm:$0x3]
    %v325 = vld [vmem:[#allocation8] sm:$0xff]
    %v326 = vld [vmem:[#allocation8 + $0x8] sm:$0xff]
    %v327 = vld [vmem:[#allocation8 + $0x10] sm:$0xff]
    %v328 = vld [vmem:[#allocation8 + $0x18] sm:$0xff]
    %v329 = vld [vmem:[#allocation8 + $0x20] sm:$0xff]
    %v330 = vld [vmem:[#allocation8 + $0x28] sm:$0xff]
    %v331 = vld [vmem:[#allocation8 + $0x30] sm:$0xff]
    %v332 = vld [vmem:[#allocation8 + $0x38] sm:$0xff]
    %v333 = vld [vmem:[#allocation8 + $0x40] sm:$0xff]
    %v334 = vld [vmem:[#allocation8 + $0x48] sm:$0xff]
    %v335 = vld [vmem:[#allocation8 + $0x50] sm:$0xff]
    %v336 = vld [vmem:[#allocation8 + $0x58] sm:$0xff]
    %v337 = vld [vmem:[#allocation10] sm:$0xff]
    %v338 = vld [vmem:[#allocation10 + $0x8] sm:$0xff]
    %v339 = vld [vmem:[#allocation10 + $0x10] sm:$0xff]
    %v340 = vld [vmem:[#allocation10 + $0x18] sm:$0xff]
    %v341 = vld [vmem:[#allocation10 + $0x20] sm:$0xff]
    %v342 = vld [vmem:[#allocation10 + $0x28] sm:$0xff]
    %v343 = vld [vmem:[#allocation10 + $0x30] sm:$0xff]
    %v344 = vld [vmem:[#allocation10 + $0x38] sm:$0xff]
    %v345 = vld [vmem:[#allocation10 + $0x40] sm:$0xff]
    %v346 = vld [vmem:[#allocation10 + $0x48] sm:$0xff]
    %v347 = vld [vmem:[#allocation10 + $0x50] sm:$0xff]
    %v348 = vld [vmem:[#allocation10 + $0x58] sm:$0xff]
    %349 = vmatprep.subr.mxu0 %v255
    %350 = vmatpush1.msra.mxu0 %v254
    %351 = vmatprep.subr.mxu0 %v257
    %352 = vmatpush1.msra.mxu0 %v256
    %353 = vmatprep.subr.mxu0 %v259
    %354 = vmatpush1.msra.mxu0 %v258
    %355 = vmatprep.subr.mxu0 %v261
    %356 = vmatpush1.msra.mxu0 %v260
    %357 = vmatprep.subr.mxu0 %v263
    %358 = vmatpush1.msra.mxu0 %v262
    %359 = vmatprep.subr.mxu0 %v265
    %360 = vmatpush1.msra.mxu0 %v264
    %361 = vmatprep.subr.mxu0 %v267
    %362 = vmatpush1.msra.mxu0 %v266
    %363 = vmatprep.subr.mxu0 %v269
    %364 = vmatpush1.msra.mxu0 %v268
    %365 = vmatprep.subr.mxu0 %v271
    %366 = vmatpush1.msra.mxu0 %v270
    %367 = vmatprep.subr.mxu0 %v273
    %368 = vmatpush1.msra.mxu0 %v272
    %369 = vmatprep.subr.mxu0 %v275
    %370 = vmatpush1.msra.mxu0 %v274
    %371 = vmatprep.subr.mxu0 %v277
    %372 = vmatpush1.msra.mxu0 %v276
    %373 = vmatprep.subr.mxu0 %v279
    %374 = vmatpush1.msra.mxu0 %v278
    %375 = vmatprep.subr.mxu0 %v281
    %376 = vmatpush1.msra.mxu0 %v280
    %377 = vmatprep.subr.mxu0 %v283
    %378 = vmatpush1.msra.mxu0 %v282
    %379 = vmatprep.subr.mxu0 %v285
    %380 = vmatpush1.msra.mxu0 %v284
    %381 = vmatprep.subr.mxu0 %v287
    %382 = vmatpush1.msra.mxu0 %v286
    %383 = vmatprep.subr.mxu0 %v289
    %384 = vmatpush1.msra.mxu0 %v288
    %385 = vmatprep.subr.mxu0 %v291
    %386 = vmatpush1.msra.mxu0 %v290
    %387 = vmatprep.subr.mxu0 %v293
    %388 = vmatpush1.msra.mxu0 %v292
    %389 = vmatprep.subr.mxu0 %v295
    %390 = vmatpush1.msra.mxu0 %v294
    %391 = vmatprep.subr.mxu0 %v297
    %392 = vmatpush1.msra.mxu0 %v296
    %393 = vmatprep.subr.mxu0 %v299
    %394 = vmatpush1.msra.mxu0 %v298
    %395 = vmatprep.subr.mxu0 %v301
    %396 = vmatpush1.msra.mxu0 %v300
    %397 = vmatprep.subr.mxu0 %v303
    %398 = vmatpush1.msra.mxu0 %v302
    %399 = vmatprep.subr.mxu0 %v305
    %400 = vmatpush1.msra.mxu0 %v304
    %401 = vmatprep.subr.mxu0 %v307
    %402 = vmatpush1.msra.mxu0 %v306
    %403 = vmatprep.subr.mxu0 %v309
    %404 = vmatpush1.msra.mxu0 %v308
    %405 = vmatprep.subr.mxu0 %v311
    %406 = vmatpush1.msra.mxu0 %v310
    %407 = vmatprep.subr.mxu0 %v313
    %408 = vmatpush1.msra.mxu0 %v312
    %409 = vmatprep.subr.mxu0 %v315
    %410 = vmatpush1.msra.mxu0 %v314
    %411 = vmatprep.subr.mxu0 %v317
    %412 = vmatpush1.msra.mxu0 %v316
    %413 = vmatprep.mubr.f32.mxu0 %v179
    %414 = vmatmul.mubr.f32.gmra.mrb[0].mxu0 %v178
    %v415 = vpop.f32.mrb[0].mxu0
    %v416 = vadd.f32 0.0, %v415
    %v417 = vpop.f32.mrb[0].mxu0
    %v418 = vadd.f32 0.0, %v417
    %419 = vmatprep.mubr.f32.mxu0 %v181
    %420 = vmatmul.mubr.f32.gmra.mrb[0].mxu0 %v180
    %v421 = vpop.f32.mrb[0].mxu0
    %v422 = vadd.f32 0.0, %v421
    %v423 = vpop.f32.mrb[0].mxu0
    %v424 = vadd.f32 0.0, %v423
    %425 = vmatprep.mubr.f32.mxu0 %v183
    %426 = vmatmul.mubr.f32.gmra.mrb[0].mxu0 %v182
    %v427 = vpop.f32.mrb[0].mxu0
    %v428 = vadd.f32 0.0, %v427
    %v429 = vpop.f32.mrb[0].mxu0
    %v430 = vadd.f32 0.0, %v429
    %431 = vmatprep.mubr.f32.mxu0 %v185
    %432 = vmatmul.mubr.f32.gmra.mrb[0].mxu0 %v184
    %v433 = vpop.f32.mrb[0].mxu0
    %v434 = vadd.f32 0.0, %v433
    %v435 = vpop.f32.mrb[0].mxu0
    %v436 = vadd.f32 0.0, %v435
    %437 = vmatprep.mubr.f32.mxu0 %v187
    %438 = vmatmul.mubr.f32.gmra.mrb[0].mxu0 %v186
    %v439 = vpop.f32.mrb[0].mxu0
    %v440 = vadd.f32 0.0, %v439
    %v441 = vpop.f32.mrb[0].mxu0
    %v442 = vadd.f32 0.0, %v441
    %443 = vmatprep.mubr.f32.mxu0 %v189
    %444 = vmatmul.mubr.f32.gmra.mrb[0].mxu0 %v188
    %v445 = vpop.f32.mrb[0].mxu0
    %v446 = vadd.f32 0.0, %v445
    %v447 = vpop.f32.mrb[0].mxu0
    %v448 = vadd.f32 0.0, %v447
    %449 = vdwg.mxu0
    %v451 = vlaneseq
    %v452 = vshrl.u32 %v451, 7
    %v453 = vsub.s32 0, %v452
    %v454 = vrot.slane %v324, %v453
    %v455 = vlaneseq
    %v456 = vshrl.u32 %v455, 7
    %v457 = vsub.s32 1, %v456
    %v458 = vrot.slane %v324, %v457
    %vm461 = vcmask 392192
    %v463 = vsel %vm461, %v318, 0
    %v466 = vsel %vm461, %v319, 0
    %v469 = vsel %vm461, %v320, 0
    %v472 = vsel %vm461, %v321, 0
    %v475 = vsel %vm461, %v322, 0
    %v478 = vsel %vm461, %v323, 0
    %480 = vmatprep.subr.mxu0 %v418
    %481 = vmatpush1.msra.mxu0 %v416
    %482 = vmatprep.subr.mxu0 %v424
    %483 = vmatpush1.msra.mxu0 %v422
    %484 = vmatprep.subr.mxu0 %v430
    %485 = vmatpush1.msra.mxu0 %v428
    %486 = vmatprep.subr.mxu0 %v436
    %487 = vmatpush1.msra.mxu0 %v434
    %488 = vmatprep.subr.mxu0 %v442
    %489 = vmatpush1.msra.mxu0 %v440
    %490 = vmatprep.subr.mxu0 %v448
    %491 = vmatpush1.msra.mxu0 %v446
    %492 = vmatprep.subr.mxu0 0.0
    %493 = vmatpush1.msra.mxu0 0.0
    %494 = vmatprep.subr.mxu0 0.0
    %495 = vmatpush1.msra.mxu0 0.0
    %496 = vmatprep.subr.mxu0 0.0
    %497 = vmatpush1.msra.mxu0 0.0
    %498 = vmatprep.subr.mxu0 0.0
    %499 = vmatpush1.msra.mxu0 0.0
    %500 = vmatprep.subr.mxu0 0.0
    %501 = vmatpush1.msra.mxu0 0.0
    %502 = vmatprep.subr.mxu0 0.0
    %503 = vmatpush1.msra.mxu0 0.0
    %504 = vmatprep.subr.mxu0 0.0
    %505 = vmatpush1.msra.mxu0 0.0
    %506 = vmatprep.subr.mxu0 0.0
    %507 = vmatpush1.msra.mxu0 0.0
    %508 = vmatprep.subr.mxu0 0.0
    %509 = vmatpush1.msra.mxu0 0.0
    %510 = vmatprep.subr.mxu0 0.0
    %511 = vmatpush1.msra.mxu0 0.0
    %512 = vmatprep.subr.mxu0 0.0
    %513 = vmatpush1.msra.mxu0 0.0
    %514 = vmatprep.subr.mxu0 0.0
    %515 = vmatpush1.msra.mxu0 0.0
    %516 = vmatprep.subr.mxu0 0.0
    %517 = vmatpush1.msra.mxu0 0.0
    %518 = vmatprep.subr.mxu0 0.0
    %519 = vmatpush1.msra.mxu0 0.0
    %520 = vmatprep.subr.mxu0 0.0
    %521 = vmatpush1.msra.mxu0 0.0
    %522 = vmatprep.subr.mxu0 0.0
    %523 = vmatpush1.msra.mxu0 0.0
    %524 = vmatprep.subr.mxu0 0.0
    %525 = vmatpush1.msra.mxu0 0.0
    %526 = vmatprep.subr.mxu0 0.0
    %527 = vmatpush1.msra.mxu0 0.0
    %528 = vmatprep.subr.mxu0 0.0
    %529 = vmatpush1.msra.mxu0 0.0
    %530 = vmatprep.subr.mxu0 0.0
    %531 = vmatpush1.msra.mxu0 0.0
    %532 = vmatprep.subr.mxu0 0.0
    %533 = vmatpush1.msra.mxu0 0.0
    %534 = vmatprep.subr.mxu0 0.0
    %535 = vmatpush1.msra.mxu0 0.0
    %536 = vmatprep.subr.mxu0 0.0
    %537 = vmatpush1.msra.mxu0 0.0
    %538 = vmatprep.subr.mxu0 0.0
    %539 = vmatpush1.msra.mxu0 0.0
    %540 = vmatprep.subr.mxu0 0.0
    %541 = vmatpush1.msra.mxu0 0.0
    %542 = vmatprep.subr.mxu0 0.0
    %543 = vmatpush1.msra.mxu0 0.0
    %544 = vmatprep.mubr.f32.mxu0 0.0
    %545 = vmatmul.mubr.f32.gmra.mrb[0].mxu0 %v463
    %v546 = vpop.f32.mrb[0].mxu0
    %v547 = vadd.f32 %v454, %v546
    %v548 = vpop.f32.mrb[0].mxu0
    %v549 = vadd.f32 %v458, %v548
    %550 = vmatprep.mubr.f32.mxu0 0.0
    %551 = vmatmul.mubr.f32.gmra.mrb[0].mxu0 %v466
    %v552 = vpop.f32.mrb[0].mxu0
    %v553 = vadd.f32 %v454, %v552
    %v554 = vpop.f32.mrb[0].mxu0
    %v555 = vadd.f32 %v458, %v554
    %556 = vmatprep.mubr.f32.mxu0 0.0
    %557 = vmatmul.mubr.f32.gmra.mrb[0].mxu0 %v469
    %v558 = vpop.f32.mrb[0].mxu0
    %v559 = vadd.f32 %v454, %v558
    %v560 = vpop.f32.mrb[0].mxu0
    %v561 = vadd.f32 %v458, %v560
    %562 = vmatprep.mubr.f32.mxu0 0.0
    %563 = vmatmul.mubr.f32.gmra.mrb[0].mxu0 %v472
    %v564 = vpop.f32.mrb[0].mxu0
    %v565 = vadd.f32 %v454, %v564
    %v566 = vpop.f32.mrb[0].mxu0
    %v567 = vadd.f32 %v458, %v566
    %568 = vmatprep.mubr.f32.mxu0 0.0
    %569 = vmatmul.mubr.f32.gmra.mrb[0].mxu0 %v475
    %v570 = vpop.f32.mrb[0].mxu0
    %v571 = vadd.f32 %v454, %v570
    %v572 = vpop.f32.mrb[0].mxu0
    %v573 = vadd.f32 %v458, %v572
    %574 = vmatprep.mubr.f32.mxu0 0.0
    %575 = vmatmul.mubr.f32.gmra.mrb[0].mxu0 %v478
    %v576 = vpop.f32.mrb[0].mxu0
    %v577 = vadd.f32 %v454, %v576
    %v578 = vpop.f32.mrb[0].mxu0
    %v579 = vadd.f32 %v458, %v578
    %580 = vdwg.mxu0
    %581 = vmatprep.subr.mxu0 %v191
    %582 = vmatpush1.msra.mxu0 %v190
    %583 = vmatprep.subr.mxu0 %v193
    %584 = vmatpush1.msra.mxu0 %v192
    %585 = vmatprep.subr.mxu0 %v195
    %586 = vmatpush1.msra.mxu0 %v194
    %587 = vmatprep.subr.mxu0 %v197
    %588 = vmatpush1.msra.mxu0 %v196
    %589 = vmatprep.subr.mxu0 %v199
    %590 = vmatpush1.msra.mxu0 %v198
    %591 = vmatprep.subr.mxu0 %v201
    %592 = vmatpush1.msra.mxu0 %v200
    %593 = vmatprep.subr.mxu0 %v203
    %594 = vmatpush1.msra.mxu0 %v202
    %595 = vmatprep.subr.mxu0 %v205
    %596 = vmatpush1.msra.mxu0 %v204
    %597 = vmatprep.subr.mxu0 %v207
    %598 = vmatpush1.msra.mxu0 %v206
    %599 = vmatprep.subr.mxu0 %v209
    %600 = vmatpush1.msra.mxu0 %v208
    %601 = vmatprep.subr.mxu0 %v211
    %602 = vmatpush1.msra.mxu0 %v210
    %603 = vmatprep.subr.mxu0 %v213
    %604 = vmatpush1.msra.mxu0 %v212
    %605 = vmatprep.subr.mxu0 %v215
    %606 = vmatpush1.msra.mxu0 %v214
    %607 = vmatprep.subr.mxu0 %v217
    %608 = vmatpush1.msra.mxu0 %v216
    %609 = vmatprep.subr.mxu0 %v219
    %610 = vmatpush1.msra.mxu0 %v218
    %611 = vmatprep.subr.mxu0 %v221
    %612 = vmatpush1.msra.mxu0 %v220
    %613 = vmatprep.subr.mxu0 %v223
    %614 = vmatpush1.msra.mxu0 %v222
    %615 = vmatprep.subr.mxu0 %v225
    %616 = vmatpush1.msra.mxu0 %v224
    %617 = vmatprep.subr.mxu0 %v227
    %618 = vmatpush1.msra.mxu0 %v226
    %619 = vmatprep.subr.mxu0 %v229
    %620 = vmatpush1.msra.mxu0 %v228
    %621 = vmatprep.subr.mxu0 %v231
    %622 = vmatpush1.msra.mxu0 %v230
    %623 = vmatprep.subr.mxu0 %v233
    %624 = vmatpush1.msra.mxu0 %v232
    %625 = vmatprep.subr.mxu0 %v235
    %626 = vmatpush1.msra.mxu0 %v234
    %627 = vmatprep.subr.mxu0 %v237
    %628 = vmatpush1.msra.mxu0 %v236
    %629 = vmatprep.subr.mxu0 %v239
    %630 = vmatpush1.msra.mxu0 %v238
    %631 = vmatprep.subr.mxu0 %v241
    %632 = vmatpush1.msra.mxu0 %v240
    %633 = vmatprep.subr.mxu0 %v243
    %634 = vmatpush1.msra.mxu0 %v242
    %635 = vmatprep.subr.mxu0 %v245
    %636 = vmatpush1.msra.mxu0 %v244
    %637 = vmatprep.subr.mxu0 %v247
    %638 = vmatpush1.msra.mxu0 %v246
    %639 = vmatprep.subr.mxu0 %v249
    %640 = vmatpush1.msra.mxu0 %v248
    %641 = vmatprep.subr.mxu0 %v251
    %642 = vmatpush1.msra.mxu0 %v250
    %643 = vmatprep.subr.mxu0 %v253
    %644 = vmatpush1.msra.mxu0 %v252
    %645 = vmatprep.mubr.f32.mxu0 %v549
    %646 = vmatmul.mubr.f32.gmra.mrb[0].mxu0 %v547
    %v647 = vpop.f32.mrb[0].mxu0
    %v648 = vadd.f32 0.0, %v647
    %v649 = vpop.f32.mrb[0].mxu0
    %v650 = vadd.f32 0.0, %v649
    %651 = vmatprep.mubr.f32.mxu0 %v555
    %652 = vmatmul.mubr.f32.gmra.mrb[0].mxu0 %v553
    %v653 = vpop.f32.mrb[0].mxu0
    %v654 = vadd.f32 0.0, %v653
    %v655 = vpop.f32.mrb[0].mxu0
    %v656 = vadd.f32 0.0, %v655
    %657 = vmatprep.mubr.f32.mxu0 %v561
    %658 = vmatmul.mubr.f32.gmra.mrb[0].mxu0 %v559
    %v659 = vpop.f32.mrb[0].mxu0
    %v660 = vadd.f32 0.0, %v659
    %v661 = vpop.f32.mrb[0].mxu0
    %v662 = vadd.f32 0.0, %v661
    %663 = vmatprep.mubr.f32.mxu0 %v567
    %664 = vmatmul.mubr.f32.gmra.mrb[0].mxu0 %v565
    %v665 = vpop.f32.mrb[0].mxu0
    %v666 = vadd.f32 0.0, %v665
    %v667 = vpop.f32.mrb[0].mxu0
    %v668 = vadd.f32 0.0, %v667
    %669 = vmatprep.mubr.f32.mxu0 %v573
    %670 = vmatmul.mubr.f32.gmra.mrb[0].mxu0 %v571
    %v671 = vpop.f32.mrb[0].mxu0
    %v672 = vadd.f32 0.0, %v671
    %v673 = vpop.f32.mrb[0].mxu0
    %v674 = vadd.f32 0.0, %v673
    %675 = vmatprep.mubr.f32.mxu0 %v579
    %676 = vmatmul.mubr.f32.gmra.mrb[0].mxu0 %v577
    %v677 = vpop.f32.mrb[0].mxu0
    %v678 = vadd.f32 0.0, %v677
    %v679 = vpop.f32.mrb[0].mxu0
    %v680 = vadd.f32 0.0, %v679
    %681 = vdwg.mxu0
    %v682 = vsub.f32 %v547, %v648
    %v683 = vsub.f32 %v549, %v650
    %v684 = vsub.f32 %v553, %v654
    %v685 = vsub.f32 %v555, %v656
    %v686 = vsub.f32 %v559, %v660
    %v687 = vsub.f32 %v561, %v662
    %v688 = vsub.f32 %v565, %v666
    %v689 = vsub.f32 %v567, %v668
    %v690 = vsub.f32 %v571, %v672
    %v691 = vsub.f32 %v573, %v674
    %v692 = vsub.f32 %v577, %v678
    %v693 = vsub.f32 %v579, %v680
    %v694 = vmul.f32 %v682, %v682
    %v695 = vmul.f32 %v683, %v683
    %v696 = vmul.f32 %v684, %v684
    %v697 = vmul.f32 %v685, %v685
    %v698 = vmul.f32 %v686, %v686
    %v699 = vmul.f32 %v687, %v687
    %v700 = vmul.f32 %v688, %v688
    %v701 = vmul.f32 %v689, %v689
    %v702 = vmul.f32 %v690, %v690
    %v703 = vmul.f32 %v691, %v691
    %v704 = vmul.f32 %v692, %v692
    %v705 = vmul.f32 %v693, %v693
    %706 = vmatprep.subr.mxu0 %v191
    %707 = vmatpush1.msra.mxu0 %v190
    %708 = vmatprep.subr.mxu0 %v193
    %709 = vmatpush1.msra.mxu0 %v192
    %710 = vmatprep.subr.mxu0 %v195
    %711 = vmatpush1.msra.mxu0 %v194
    %712 = vmatprep.subr.mxu0 %v197
    %713 = vmatpush1.msra.mxu0 %v196
    %714 = vmatprep.subr.mxu0 %v199
    %715 = vmatpush1.msra.mxu0 %v198
    %716 = vmatprep.subr.mxu0 %v201
    %717 = vmatpush1.msra.mxu0 %v200
    %718 = vmatprep.subr.mxu0 %v203
    %719 = vmatpush1.msra.mxu0 %v202
    %720 = vmatprep.subr.mxu0 %v205
    %721 = vmatpush1.msra.mxu0 %v204
    %722 = vmatprep.subr.mxu0 %v207
    %723 = vmatpush1.msra.mxu0 %v206
    %724 = vmatprep.subr.mxu0 %v209
    %725 = vmatpush1.msra.mxu0 %v208
    %726 = vmatprep.subr.mxu0 %v211
    %727 = vmatpush1.msra.mxu0 %v210
    %728 = vmatprep.subr.mxu0 %v213
    %729 = vmatpush1.msra.mxu0 %v212
    %730 = vmatprep.subr.mxu0 %v215
    %731 = vmatpush1.msra.mxu0 %v214
    %732 = vmatprep.subr.mxu0 %v217
    %733 = vmatpush1.msra.mxu0 %v216
    %734 = vmatprep.subr.mxu0 %v219
    %735 = vmatpush1.msra.mxu0 %v218
    %736 = vmatprep.subr.mxu0 %v221
    %737 = vmatpush1.msra.mxu0 %v220
    %738 = vmatprep.subr.mxu0 %v223
    %739 = vmatpush1.msra.mxu0 %v222
    %740 = vmatprep.subr.mxu0 %v225
    %741 = vmatpush1.msra.mxu0 %v224
    %742 = vmatprep.subr.mxu0 %v227
    %743 = vmatpush1.msra.mxu0 %v226
    %744 = vmatprep.subr.mxu0 %v229
    %745 = vmatpush1.msra.mxu0 %v228
    %746 = vmatprep.subr.mxu0 %v231
    %747 = vmatpush1.msra.mxu0 %v230
    %748 = vmatprep.subr.mxu0 %v233
    %749 = vmatpush1.msra.mxu0 %v232
    %750 = vmatprep.subr.mxu0 %v235
    %751 = vmatpush1.msra.mxu0 %v234
    %752 = vmatprep.subr.mxu0 %v237
    %753 = vmatpush1.msra.mxu0 %v236
    %754 = vmatprep.subr.mxu0 %v239
    %755 = vmatpush1.msra.mxu0 %v238
    %756 = vmatprep.subr.mxu0 %v241
    %757 = vmatpush1.msra.mxu0 %v240
    %758 = vmatprep.subr.mxu0 %v243
    %759 = vmatpush1.msra.mxu0 %v242
    %760 = vmatprep.subr.mxu0 %v245
    %761 = vmatpush1.msra.mxu0 %v244
    %762 = vmatprep.subr.mxu0 %v247
    %763 = vmatpush1.msra.mxu0 %v246
    %764 = vmatprep.subr.mxu0 %v249
    %765 = vmatpush1.msra.mxu0 %v248
    %766 = vmatprep.subr.mxu0 %v251
    %767 = vmatpush1.msra.mxu0 %v250
    %768 = vmatprep.subr.mxu0 %v253
    %769 = vmatpush1.msra.mxu0 %v252
    %770 = vmatprep.mubr.f32.mxu0 %v695
    %771 = vmatmul.mubr.f32.gmra.mrb[0].mxu0 %v694
    %v772 = vpop.f32.mrb[0].mxu0
    %v773 = vadd.f32 1e-05, %v772
    %v774 = vpop.f32.mrb[0].mxu0
    %v775 = vadd.f32 1e-05, %v774
    %776 = vmatprep.mubr.f32.mxu0 %v697
    %777 = vmatmul.mubr.f32.gmra.mrb[0].mxu0 %v696
    %v778 = vpop.f32.mrb[0].mxu0
    %v779 = vadd.f32 1e-05, %v778
    %v780 = vpop.f32.mrb[0].mxu0
    %v781 = vadd.f32 1e-05, %v780
    %782 = vmatprep.mubr.f32.mxu0 %v699
    %783 = vmatmul.mubr.f32.gmra.mrb[0].mxu0 %v698
    %v784 = vpop.f32.mrb[0].mxu0
    %v785 = vadd.f32 1e-05, %v784
    %v786 = vpop.f32.mrb[0].mxu0
    %v787 = vadd.f32 1e-05, %v786
    %788 = vmatprep.mubr.f32.mxu0 %v701
    %789 = vmatmul.mubr.f32.gmra.mrb[0].mxu0 %v700
    %v790 = vpop.f32.mrb[0].mxu0
    %v791 = vadd.f32 1e-05, %v790
    %v792 = vpop.f32.mrb[0].mxu0
    %v793 = vadd.f32 1e-05, %v792
    %794 = vmatprep.mubr.f32.mxu0 %v703
    %795 = vmatmul.mubr.f32.gmra.mrb[0].mxu0 %v702
    %v796 = vpop.f32.mrb[0].mxu0
    %v797 = vadd.f32 1e-05, %v796
    %v798 = vpop.f32.mrb[0].mxu0
    %v799 = vadd.f32 1e-05, %v798
    %800 = vmatprep.mubr.f32.mxu0 %v705
    %801 = vmatmul.mubr.f32.gmra.mrb[0].mxu0 %v704
    %v802 = vpop.f32.mrb[0].mxu0
    %v803 = vadd.f32 1e-05, %v802
    %v804 = vpop.f32.mrb[0].mxu0
    %v805 = vadd.f32 1e-05, %v804
    %806 = vdwg.mxu0
    %v807 = vrsqrt.pop %v773
    %v808 = vrsqrt.pop %v775
    %v809 = vrsqrt.pop %v779
    %v810 = vrsqrt.pop %v781
    %v811 = vrsqrt.pop %v785
    %v812 = vrsqrt.pop %v787
    %v813 = vrsqrt.pop %v791
    %v814 = vrsqrt.pop %v793
    %v815 = vrsqrt.pop %v797
    %v816 = vrsqrt.pop %v799
    %v817 = vrsqrt.pop %v803
    %v818 = vrsqrt.pop %v805
    %v819 = vmul.f32 %v682, %v807
    %v820 = vmul.f32 %v683, %v808
    %v821 = vmul.f32 %v684, %v809
    %v822 = vmul.f32 %v685, %v810
    %v823 = vmul.f32 %v686, %v811
    %v824 = vmul.f32 %v687, %v812
    %v825 = vmul.f32 %v688, %v813
    %v826 = vmul.f32 %v689, %v814
    %v827 = vmul.f32 %v690, %v815
    %v828 = vmul.f32 %v691, %v816
    %v829 = vmul.f32 %v692, %v817
    %v830 = vmul.f32 %v693, %v818
    %v831 = vmul.f32 %v819, %v325
    %v832 = vmul.f32 %v820, %v326
    %v833 = vmul.f32 %v821, %v327
    %v834 = vmul.f32 %v822, %v328
    %v835 = vmul.f32 %v823, %v329
    %v836 = vmul.f32 %v824, %v330
    %v837 = vmul.f32 %v825, %v331
    %v838 = vmul.f32 %v826, %v332
    %v839 = vmul.f32 %v827, %v333
    %v840 = vmul.f32 %v828, %v334
    %v841 = vmul.f32 %v829, %v335
    %v842 = vmul.f32 %v830, %v336
    %v843 = vadd.f32 %v831, %v337
    %v844 = vadd.f32 %v832, %v338
    %v845 = vadd.f32 %v833, %v339
    %v846 = vadd.f32 %v834, %v340
    %v847 = vadd.f32 %v835, %v341
    %v848 = vadd.f32 %v836, %v342
    %v849 = vadd.f32 %v837, %v343
    %v850 = vadd.f32 %v838, %v344
    %v851 = vadd.f32 %v839, %v345
    %v852 = vadd.f32 %v840, %v346
    %v853 = vadd.f32 %v841, %v347
    %v854 = vadd.f32 %v842, %v348
    %v855 = vtanh.pop %v843
    %v856 = vtanh.pop %v844
    %v857 = vtanh.pop %v845
    %v858 = vtanh.pop %v846
    %v859 = vtanh.pop %v847
    %v860 = vtanh.pop %v848
    %v861 = vtanh.pop %v849
    %v862 = vtanh.pop %v850
    %v863 = vtanh.pop %v851
    %v864 = vtanh.pop %v852
    %v865 = vtanh.pop %v853
    %v866 = vtanh.pop %v854
    %v867 = vld [vmem:[#allocation11] sm:$0xff]
    %v868 = vld [vmem:[#allocation11 + $0x8] sm:$0xff]
    %v869 = vld [vmem:[#allocation11 + $0x10] sm:$0xff]
    %v870 = vld [vmem:[#allocation11 + $0x18] sm:$0xff]
    %v871 = vld [vmem:[#allocation11 + $0x20] sm:$0xff]
    %v872 = vld [vmem:[#allocation11 + $0x28] sm:$0xff]
    %v873 = vld [vmem:[#allocation11 + $0x30] sm:$0xff]
    %v874 = vld [vmem:[#allocation11 + $0x38] sm:$0xff]
    %v875 = vld [vmem:[#allocation11 + $0x40] sm:$0xff]
    %v876 = vld [vmem:[#allocation11 + $0x48] sm:$0xff]
    %v877 = vld [vmem:[#allocation11 + $0x50] sm:$0xff]
    %v878 = vld [vmem:[#allocation11 + $0x58] sm:$0xff]
    %v879 = vld [vmem:[#allocation11 + $0x60] sm:$0xff]
    %v880 = vld [vmem:[#allocation11 + $0x68] sm:$0xff]
    %v881 = vld [vmem:[#allocation11 + $0x70] sm:$0xff]
    %v882 = vld [vmem:[#allocation11 + $0x78] sm:$0xff]
    %v883 = vld [vmem:[#allocation11 + $0x80] sm:$0xff]
    %v884 = vld [vmem:[#allocation11 + $0x88] sm:$0xff]
    %v885 = vld [vmem:[#allocation11 + $0x90] sm:$0xff]
    %v886 = vld [vmem:[#allocation11 + $0x98] sm:$0xff]
    %v887 = vld [vmem:[#allocation11 + $0xa0] sm:$0xff]
    %v888 = vld [vmem:[#allocation11 + $0xa8] sm:$0xff]
    %v889 = vld [vmem:[#allocation11 + $0xb0] sm:$0xff]
    %v890 = vld [vmem:[#allocation11 + $0xb8] sm:$0xff]
    %v891 = vld [vmem:[#allocation11 + $0xc0] sm:$0xff]
    %v892 = vld [vmem:[#allocation11 + $0xc8] sm:$0xff]
    %v893 = vld [vmem:[#allocation11 + $0xd0] sm:$0xff]
    %v894 = vld [vmem:[#allocation11 + $0xd8] sm:$0xff]
    %v895 = vld [vmem:[#allocation11 + $0xe0] sm:$0xff]
    %v896 = vld [vmem:[#allocation11 + $0xe8] sm:$0xff]
    %v897 = vld [vmem:[#allocation11 + $0xf0] sm:$0xff]
    %v898 = vld [vmem:[#allocation11 + $0xf8] sm:$0xff]
    %v899 = vld [vmem:[#allocation11 + $0x100] sm:$0xff]
    %v900 = vld [vmem:[#allocation11 + $0x108] sm:$0xff]
    %v901 = vld [vmem:[#allocation11 + $0x110] sm:$0xff]
    %v902 = vld [vmem:[#allocation11 + $0x118] sm:$0xff]
    %v903 = vld [vmem:[#allocation11 + $0x120] sm:$0xff]
    %v904 = vld [vmem:[#allocation11 + $0x128] sm:$0xff]
    %v905 = vld [vmem:[#allocation11 + $0x130] sm:$0xff]
    %v906 = vld [vmem:[#allocation11 + $0x138] sm:$0xff]
    %v907 = vld [vmem:[#allocation11 + $0x140] sm:$0xff]
    %v908 = vld [vmem:[#allocation11 + $0x148] sm:$0xff]
    %v909 = vld [vmem:[#allocation11 + $0x150] sm:$0xff]
    %v910 = vld [vmem:[#allocation11 + $0x158] sm:$0xff]
    %v911 = vld [vmem:[#allocation11 + $0x160] sm:$0xff]
    %v912 = vld [vmem:[#allocation11 + $0x168] sm:$0xff]
    %v913 = vld [vmem:[#allocation11 + $0x170] sm:$0xff]
    %v914 = vld [vmem:[#allocation11 + $0x178] sm:$0xff]
    %v915 = vld [vmem:[#allocation11 + $0x180] sm:$0xff]
    %v916 = vld [vmem:[#allocation11 + $0x188] sm:$0xff]
    %v917 = vld [vmem:[#allocation11 + $0x190] sm:$0xff]
    %v918 = vld [vmem:[#allocation11 + $0x198] sm:$0xff]
    %v919 = vld [vmem:[#allocation11 + $0x1a0] sm:$0xff]
    %v920 = vld [vmem:[#allocation11 + $0x1a8] sm:$0xff]
    %v921 = vld [vmem:[#allocation11 + $0x1b0] sm:$0xff]
    %v922 = vld [vmem:[#allocation11 + $0x1b8] sm:$0xff]
    %v923 = vld [vmem:[#allocation11 + $0x1c0] sm:$0xff]
    %v924 = vld [vmem:[#allocation11 + $0x1c8] sm:$0xff]
    %v925 = vld [vmem:[#allocation11 + $0x1d0] sm:$0xff]
    %v926 = vld [vmem:[#allocation11 + $0x1d8] sm:$0xff]
    %v927 = vld [vmem:[#allocation11 + $0x1e0] sm:$0xff]
    %v928 = vld [vmem:[#allocation11 + $0x1e8] sm:$0xff]
    %v929 = vld [vmem:[#allocation11 + $0x1f0] sm:$0xff]
    %v930 = vld [vmem:[#allocation11 + $0x1f8] sm:$0xff]
    %v931 = vld [vmem:[#allocation13] sm:$0xff]
    %v932 = vld [vmem:[#allocation13 + $0x8] sm:$0xff]
    %v933 = vld [vmem:[#allocation13 + $0x10] sm:$0xff]
    %v934 = vld [vmem:[#allocation13 + $0x18] sm:$0xff]
    %v935 = vld [vmem:[#allocation13 + $0x20] sm:$0xff]
    %v936 = vld [vmem:[#allocation13 + $0x28] sm:$0xff]
    %v937 = vld [vmem:[%s8] sm:$0x3]
    %v938 = vld [vmem:[#allocation14] sm:$0xff]
    %v939 = vld [vmem:[#allocation14 + $0x8] sm:$0xff]
    %v940 = vld [vmem:[#allocation14 + $0x10] sm:$0xff]
    %v941 = vld [vmem:[#allocation14 + $0x18] sm:$0xff]
    %v942 = vld [vmem:[#allocation14 + $0x20] sm:$0xff]
    %v943 = vld [vmem:[#allocation14 + $0x28] sm:$0xff]
    %v944 = vld [vmem:[#allocation14 + $0x30] sm:$0xff]
    %v945 = vld [vmem:[#allocation14 + $0x38] sm:$0xff]
    %v946 = vld [vmem:[#allocation14 + $0x40] sm:$0xff]
    %v947 = vld [vmem:[#allocation14 + $0x48] sm:$0xff]
    %v948 = vld [vmem:[#allocation14 + $0x50] sm:$0xff]
    %v949 = vld [vmem:[#allocation14 + $0x58] sm:$0xff]
    %v950 = vld [vmem:[#allocation16] sm:$0xff]
    %v951 = vld [vmem:[#allocation16 + $0x8] sm:$0xff]
    %v952 = vld [vmem:[#allocation16 + $0x10] sm:$0xff]
    %v953 = vld [vmem:[#allocation16 + $0x18] sm:$0xff]
    %v954 = vld [vmem:[#allocation16 + $0x20] sm:$0xff]
    %v955 = vld [vmem:[#allocation16 + $0x28] sm:$0xff]
    %v956 = vld [vmem:[#allocation16 + $0x30] sm:$0xff]
    %v957 = vld [vmem:[#allocation16 + $0x38] sm:$0xff]
    %v958 = vld [vmem:[#allocation16 + $0x40] sm:$0xff]
    %v959 = vld [vmem:[#allocation16 + $0x48] sm:$0xff]
    %v960 = vld [vmem:[#allocation16 + $0x50] sm:$0xff]
    %v961 = vld [vmem:[#allocation16 + $0x58] sm:$0xff]
    %962 = vmatprep.subr.mxu0 %v868
    %963 = vmatpush1.msra.mxu0 %v867
    %964 = vmatprep.subr.mxu0 %v870
    %965 = vmatpush1.msra.mxu0 %v869
    %966 = vmatprep.subr.mxu0 %v872
    %967 = vmatpush1.msra.mxu0 %v871
    %968 = vmatprep.subr.mxu0 %v874
    %969 = vmatpush1.msra.mxu0 %v873
    %970 = vmatprep.subr.mxu0 %v876
    %971 = vmatpush1.msra.mxu0 %v875
    %972 = vmatprep.subr.mxu0 %v878
    %973 = vmatpush1.msra.mxu0 %v877
    %974 = vmatprep.subr.mxu0 %v880
    %975 = vmatpush1.msra.mxu0 %v879
    %976 = vmatprep.subr.mxu0 %v882
    %977 = vmatpush1.msra.mxu0 %v881
    %978 = vmatprep.subr.mxu0 %v884
    %979 = vmatpush1.msra.mxu0 %v883
    %980 = vmatprep.subr.mxu0 %v886
    %981 = vmatpush1.msra.mxu0 %v885
    %982 = vmatprep.subr.mxu0 %v888
    %983 = vmatpush1.msra.mxu0 %v887
    %984 = vmatprep.subr.mxu0 %v890
    %985 = vmatpush1.msra.mxu0 %v889
    %986 = vmatprep.subr.mxu0 %v892
    %987 = vmatpush1.msra.mxu0 %v891
    %988 = vmatprep.subr.mxu0 %v894
    %989 = vmatpush1.msra.mxu0 %v893
    %990 = vmatprep.subr.mxu0 %v896
    %991 = vmatpush1.msra.mxu0 %v895
    %992 = vmatprep.subr.mxu0 %v898
    %993 = vmatpush1.msra.mxu0 %v897
    %994 = vmatprep.subr.mxu0 %v900
    %995 = vmatpush1.msra.mxu0 %v899
    %996 = vmatprep.subr.mxu0 %v902
    %997 = vmatpush1.msra.mxu0 %v901
    %998 = vmatprep.subr.mxu0 %v904
    %999 = vmatpush1.msra.mxu0 %v903
    %1000 = vmatprep.subr.mxu0 %v906
    %1001 = vmatpush1.msra.mxu0 %v905
    %1002 = vmatprep.subr.mxu0 %v908
    %1003 = vmatpush1.msra.mxu0 %v907
    %1004 = vmatprep.subr.mxu0 %v910
    %1005 = vmatpush1.msra.mxu0 %v909
    %1006 = vmatprep.subr.mxu0 %v912
    %1007 = vmatpush1.msra.mxu0 %v911
    %1008 = vmatprep.subr.mxu0 %v914
    %1009 = vmatpush1.msra.mxu0 %v913
    %1010 = vmatprep.subr.mxu0 %v916
    %1011 = vmatpush1.msra.mxu0 %v915
    %1012 = vmatprep.subr.mxu0 %v918
    %1013 = vmatpush1.msra.mxu0 %v917
    %1014 = vmatprep.subr.mxu0 %v920
    %1015 = vmatpush1.msra.mxu0 %v919
    %1016 = vmatprep.subr.mxu0 %v922
    %1017 = vmatpush1.msra.mxu0 %v921
    %1018 = vmatprep.subr.mxu0 %v924
    %1019 = vmatpush1.msra.mxu0 %v923
    %1020 = vmatprep.subr.mxu0 %v926
    %1021 = vmatpush1.msra.mxu0 %v925
    %1022 = vmatprep.subr.mxu0 %v928
    %1023 = vmatpush1.msra.mxu0 %v927
    %1024 = vmatprep.subr.mxu0 %v930
    %1025 = vmatpush1.msra.mxu0 %v929
    %1026 = vmatprep.mubr.f32.mxu0 %v856
    %1027 = vmatmul.mubr.f32.gmra.mrb[0].mxu0 %v855
    %v1028 = vpop.f32.mrb[0].mxu0
    %v1029 = vadd.f32 0.0, %v1028
    %v1030 = vpop.f32.mrb[0].mxu0
    %v1031 = vadd.f32 0.0, %v1030
    %1032 = vmatprep.mubr.f32.mxu0 %v858
    %1033 = vmatmul.mubr.f32.gmra.mrb[0].mxu0 %v857
    %v1034 = vpop.f32.mrb[0].mxu0
    %v1035 = vadd.f32 0.0, %v1034
    %v1036 = vpop.f32.mrb[0].mxu0
    %v1037 = vadd.f32 0.0, %v1036
    %1038 = vmatprep.mubr.f32.mxu0 %v860
    %1039 = vmatmul.mubr.f32.gmra.mrb[0].mxu0 %v859
    %v1040 = vpop.f32.mrb[0].mxu0
    %v1041 = vadd.f32 0.0, %v1040
    %v1042 = vpop.f32.mrb[0].mxu0
    %v1043 = vadd.f32 0.0, %v1042
    %1044 = vmatprep.mubr.f32.mxu0 %v862
    %1045 = vmatmul.mubr.f32.gmra.mrb[0].mxu0 %v861
    %v1046 = vpop.f32.mrb[0].mxu0
    %v1047 = vadd.f32 0.0, %v1046
    %v1048 = vpop.f32.mrb[0].mxu0
    %v1049 = vadd.f32 0.0, %v1048
    %1050 = vmatprep.mubr.f32.mxu0 %v864
    %1051 = vmatmul.mubr.f32.gmra.mrb[0].mxu0 %v863
    %v1052 = vpop.f32.mrb[0].mxu0
    %v1053 = vadd.f32 0.0, %v1052
    %v1054 = vpop.f32.mrb[0].mxu0
    %v1055 = vadd.f32 0.0, %v1054
    %1056 = vmatprep.mubr.f32.mxu0 %v866
    %1057 = vmatmul.mubr.f32.gmra.mrb[0].mxu0 %v865
    %v1058 = vpop.f32.mrb[0].mxu0
    %v1059 = vadd.f32 0.0, %v1058
    %v1060 = vpop.f32.mrb[0].mxu0
    %v1061 = vadd.f32 0.0, %v1060
    %1062 = vdwg.mxu0
    %v1064 = vlaneseq
    %v1065 = vshrl.u32 %v1064, 7
    %v1066 = vsub.s32 0, %v1065
    %v1067 = vrot.slane %v937, %v1066
    %v1068 = vlaneseq
    %v1069 = vshrl.u32 %v1068, 7
    %v1070 = vsub.s32 1, %v1069
    %v1071 = vrot.slane %v937, %v1070
    %v1075 = vsel %vm461, %v931, 0
    %v1078 = vsel %vm461, %v932, 0
    %v1081 = vsel %vm461, %v933, 0
    %v1084 = vsel %vm461, %v934, 0
    %v1087 = vsel %vm461, %v935, 0
    %v1090 = vsel %vm461, %v936, 0
    %1092 = vmatprep.subr.mxu0 %v1031
    %1093 = vmatpush1.msra.mxu0 %v1029
    %1094 = vmatprep.subr.mxu0 %v1037
    %1095 = vmatpush1.msra.mxu0 %v1035
    %1096 = vmatprep.subr.mxu0 %v1043
    %1097 = vmatpush1.msra.mxu0 %v1041
    %1098 = vmatprep.subr.mxu0 %v1049
    %1099 = vmatpush1.msra.mxu0 %v1047
    %1100 = vmatprep.subr.mxu0 %v1055
    %1101 = vmatpush1.msra.mxu0 %v1053
    %1102 = vmatprep.subr.mxu0 %v1061
    %1103 = vmatpush1.msra.mxu0 %v1059
    %1104 = vmatprep.subr.mxu0 0.0
    %1105 = vmatpush1.msra.mxu0 0.0
    %1106 = vmatprep.subr.mxu0 0.0
    %1107 = vmatpush1.msra.mxu0 0.0
    %1108 = vmatprep.subr.mxu0 0.0
    %1109 = vmatpush1.msra.mxu0 0.0
    %1110 = vmatprep.subr.mxu0 0.0
    %1111 = vmatpush1.msra.mxu0 0.0
    %1112 = vmatprep.subr.mxu0 0.0
    %1113 = vmatpush1.msra.mxu0 0.0
    %1114 = vmatprep.subr.mxu0 0.0
    %1115 = vmatpush1.msra.mxu0 0.0
    %1116 = vmatprep.subr.mxu0 0.0
    %1117 = vmatpush1.msra.mxu0 0.0
    %1118 = vmatprep.subr.mxu0 0.0
    %1119 = vmatpush1.msra.mxu0 0.0
    %1120 = vmatprep.subr.mxu0 0.0
    %1121 = vmatpush1.msra.mxu0 0.0
    %1122 = vmatprep.subr.mxu0 0.0
    %1123 = vmatpush1.msra.mxu0 0.0
    %1124 = vmatprep.subr.mxu0 0.0
    %1125 = vmatpush1.msra.mxu0 0.0
    %1126 = vmatprep.subr.mxu0 0.0
    %1127 = vmatpush1.msra.mxu0 0.0
    %1128 = vmatprep.subr.mxu0 0.0
    %1129 = vmatpush1.msra.mxu0 0.0
    %1130 = vmatprep.subr.mxu0 0.0
    %1131 = vmatpush1.msra.mxu0 0.0
    %1132 = vmatprep.subr.mxu0 0.0
    %1133 = vmatpush1.msra.mxu0 0.0
    %1134 = vmatprep.subr.mxu0 0.0
    %1135 = vmatpush1.msra.mxu0 0.0
    %1136 = vmatprep.subr.mxu0 0.0
    %1137 = vmatpush1.msra.mxu0 0.0
    %1138 = vmatprep.subr.mxu0 0.0
    %1139 = vmatpush1.msra.mxu0 0.0
    %1140 = vmatprep.subr.mxu0 0.0
    %1141 = vmatpush1.msra.mxu0 0.0
    %1142 = vmatprep.subr.mxu0 0.0
    %1143 = vmatpush1.msra.mxu0 0.0
    %1144 = vmatprep.subr.mxu0 0.0
    %1145 = vmatpush1.msra.mxu0 0.0
    %1146 = vmatprep.subr.mxu0 0.0
    %1147 = vmatpush1.msra.mxu0 0.0
    %1148 = vmatprep.subr.mxu0 0.0
    %1149 = vmatpush1.msra.mxu0 0.0
    %1150 = vmatprep.subr.mxu0 0.0
    %1151 = vmatpush1.msra.mxu0 0.0
    %1152 = vmatprep.subr.mxu0 0.0
    %1153 = vmatpush1.msra.mxu0 0.0
    %1154 = vmatprep.subr.mxu0 0.0
    %1155 = vmatpush1.msra.mxu0 0.0
    %1156 = vmatprep.mubr.f32.mxu0 0.0
    %1157 = vmatmul.mubr.f32.gmra.mrb[0].mxu0 %v1075
    %v1158 = vpop.f32.mrb[0].mxu0
    %v1159 = vadd.f32 %v1067, %v1158
    %v1160 = vpop.f32.mrb[0].mxu0
    %v1161 = vadd.f32 %v1071, %v1160
    %1162 = vmatprep.mubr.f32.mxu0 0.0
    %1163 = vmatmul.mubr.f32.gmra.mrb[0].mxu0 %v1078
    %v1164 = vpop.f32.mrb[0].mxu0
    %v1165 = vadd.f32 %v1067, %v1164
    %v1166 = vpop.f32.mrb[0].mxu0
    %v1167 = vadd.f32 %v1071, %v1166
    %1168 = vmatprep.mubr.f32.mxu0 0.0
    %1169 = vmatmul.mubr.f32.gmra.mrb[0].mxu0 %v1081
    %v1170 = vpop.f32.mrb[0].mxu0
    %v1171 = vadd.f32 %v1067, %v1170
    %v1172 = vpop.f32.mrb[0].mxu0
    %v1173 = vadd.f32 %v1071, %v1172
    %1174 = vmatprep.mubr.f32.mxu0 0.0
    %1175 = vmatmul.mubr.f32.gmra.mrb[0].mxu0 %v1084
    %v1176 = vpop.f32.mrb[0].mxu0
    %v1177 = vadd.f32 %v1067, %v1176
    %v1178 = vpop.f32.mrb[0].mxu0
    %v1179 = vadd.f32 %v1071, %v1178
    %1180 = vmatprep.mubr.f32.mxu0 0.0
    %1181 = vmatmul.mubr.f32.gmra.mrb[0].mxu0 %v1087
    %v1182 = vpop.f32.mrb[0].mxu0
    %v1183 = vadd.f32 %v1067, %v1182
    %v1184 = vpop.f32.mrb[0].mxu0
    %v1185 = vadd.f32 %v1071, %v1184
    %1186 = vmatprep.mubr.f32.mxu0 0.0
    %1187 = vmatmul.mubr.f32.gmra.mrb[0].mxu0 %v1090
    %v1188 = vpop.f32.mrb[0].mxu0
    %v1189 = vadd.f32 %v1067, %v1188
    %v1190 = vpop.f32.mrb[0].mxu0
    %v1191 = vadd.f32 %v1071, %v1190
    %1192 = vdwg.mxu0
    %1193 = vmatprep.subr.mxu0 %v191
    %1194 = vmatpush1.msra.mxu0 %v190
    %1195 = vmatprep.subr.mxu0 %v193
    %1196 = vmatpush1.msra.mxu0 %v192
    %1197 = vmatprep.subr.mxu0 %v195
    %1198 = vmatpush1.msra.mxu0 %v194
    %1199 = vmatprep.subr.mxu0 %v197
    %1200 = vmatpush1.msra.mxu0 %v196
    %1201 = vmatprep.subr.mxu0 %v199
    %1202 = vmatpush1.msra.mxu0 %v198
    %1203 = vmatprep.subr.mxu0 %v201
    %1204 = vmatpush1.msra.mxu0 %v200
    %1205 = vmatprep.subr.mxu0 %v203
    %1206 = vmatpush1.msra.mxu0 %v202
    %1207 = vmatprep.subr.mxu0 %v205
    %1208 = vmatpush1.msra.mxu0 %v204
    %1209 = vmatprep.subr.mxu0 %v207
    %1210 = vmatpush1.msra.mxu0 %v206
    %1211 = vmatprep.subr.mxu0 %v209
    %1212 = vmatpush1.msra.mxu0 %v208
    %1213 = vmatprep.subr.mxu0 %v211
    %1214 = vmatpush1.msra.mxu0 %v210
    %1215 = vmatprep.subr.mxu0 %v213
    %1216 = vmatpush1.msra.mxu0 %v212
    %1217 = vmatprep.subr.mxu0 %v215
    %1218 = vmatpush1.msra.mxu0 %v214
    %1219 = vmatprep.subr.mxu0 %v217
    %1220 = vmatpush1.msra.mxu0 %v216
    %1221 = vmatprep.subr.mxu0 %v219
    %1222 = vmatpush1.msra.mxu0 %v218
    %1223 = vmatprep.subr.mxu0 %v221
    %1224 = vmatpush1.msra.mxu0 %v220
    %1225 = vmatprep.subr.mxu0 %v223
    %1226 = vmatpush1.msra.mxu0 %v222
    %1227 = vmatprep.subr.mxu0 %v225
    %1228 = vmatpush1.msra.mxu0 %v224
    %1229 = vmatprep.subr.mxu0 %v227
    %1230 = vmatpush1.msra.mxu0 %v226
    %1231 = vmatprep.subr.mxu0 %v229
    %1232 = vmatpush1.msra.mxu0 %v228
    %1233 = vmatprep.subr.mxu0 %v231
    %1234 = vmatpush1.msra.mxu0 %v230
    %1235 = vmatprep.subr.mxu0 %v233
    %1236 = vmatpush1.msra.mxu0 %v232
    %1237 = vmatprep.subr.mxu0 %v235
    %1238 = vmatpush1.msra.mxu0 %v234
    %1239 = vmatprep.subr.mxu0 %v237
    %1240 = vmatpush1.msra.mxu0 %v236
    %1241 = vmatprep.subr.mxu0 %v239
    %1242 = vmatpush1.msra.mxu0 %v238
    %1243 = vmatprep.subr.mxu0 %v241
    %1244 = vmatpush1.msra.mxu0 %v240
    %1245 = vmatprep.subr.mxu0 %v243
    %1246 = vmatpush1.msra.mxu0 %v242
    %1247 = vmatprep.subr.mxu0 %v245
    %1248 = vmatpush1.msra.mxu0 %v244
    %1249 = vmatprep.subr.mxu0 %v247
    %1250 = vmatpush1.msra.mxu0 %v246
    %1251 = vmatprep.subr.mxu0 %v249
    %1252 = vmatpush1.msra.mxu0 %v248
    %1253 = vmatprep.subr.mxu0 %v251
    %1254 = vmatpush1.msra.mxu0 %v250
    %1255 = vmatprep.subr.mxu0 %v253
    %1256 = vmatpush1.msra.mxu0 %v252
    %1257 = vmatprep.mubr.f32.mxu0 %v1161
    %1258 = vmatmul.mubr.f32.gmra.mrb[0].mxu0 %v1159
    %v1259 = vpop.f32.mrb[0].mxu0
    %v1260 = vadd.f32 0.0, %v1259
    %v1261 = vpop.f32.mrb[0].mxu0
    %v1262 = vadd.f32 0.0, %v1261
    %1263 = vmatprep.mubr.f32.mxu0 %v1167
    %1264 = vmatmul.mubr.f32.gmra.mrb[0].mxu0 %v1165
    %v1265 = vpop.f32.mrb[0].mxu0
    %v1266 = vadd.f32 0.0, %v1265
    %v1267 = vpop.f32.mrb[0].mxu0
    %v1268 = vadd.f32 0.0, %v1267
    %1269 = vmatprep.mubr.f32.mxu0 %v1173
    %1270 = vmatmul.mubr.f32.gmra.mrb[0].mxu0 %v1171
    %v1271 = vpop.f32.mrb[0].mxu0
    %v1272 = vadd.f32 0.0, %v1271
    %v1273 = vpop.f32.mrb[0].mxu0
    %v1274 = vadd.f32 0.0, %v1273
    %1275 = vmatprep.mubr.f32.mxu0 %v1179
    %1276 = vmatmul.mubr.f32.gmra.mrb[0].mxu0 %v1177
    %v1277 = vpop.f32.mrb[0].mxu0
    %v1278 = vadd.f32 0.0, %v1277
    %v1279 = vpop.f32.mrb[0].mxu0
    %v1280 = vadd.f32 0.0, %v1279
    %1281 = vmatprep.mubr.f32.mxu0 %v1185
    %1282 = vmatmul.mubr.f32.gmra.mrb[0].mxu0 %v1183
    %v1283 = vpop.f32.mrb[0].mxu0
    %v1284 = vadd.f32 0.0, %v1283
    %v1285 = vpop.f32.mrb[0].mxu0
    %v1286 = vadd.f32 0.0, %v1285
    %1287 = vmatprep.mubr.f32.mxu0 %v1191
    %1288 = vmatmul.mubr.f32.gmra.mrb[0].mxu0 %v1189
    %v1289 = vpop.f32.mrb[0].mxu0
    %v1290 = vadd.f32 0.0, %v1289
    %v1291 = vpop.f32.mrb[0].mxu0
    %v1292 = vadd.f32 0.0, %v1291
    %1293 = vdwg.mxu0
    %v1294 = vsub.f32 %v1159, %v1260
    %v1295 = vsub.f32 %v1161, %v1262
    %v1296 = vsub.f32 %v1165, %v1266
    %v1297 = vsub.f32 %v1167, %v1268
    %v1298 = vsub.f32 %v1171, %v1272
    %v1299 = vsub.f32 %v1173, %v1274
    %v1300 = vsub.f32 %v1177, %v1278
    %v1301 = vsub.f32 %v1179, %v1280
    %v1302 = vsub.f32 %v1183, %v1284
    %v1303 = vsub.f32 %v1185, %v1286
    %v1304 = vsub.f32 %v1189, %v1290
    %v1305 = vsub.f32 %v1191, %v1292
    %v1306 = vmul.f32 %v1294, %v1294
    %v1307 = vmul.f32 %v1295, %v1295
    %v1308 = vmul.f32 %v1296, %v1296
    %v1309 = vmul.f32 %v1297, %v1297
    %v1310 = vmul.f32 %v1298, %v1298
    %v1311 = vmul.f32 %v1299, %v1299
    %v1312 = vmul.f32 %v1300, %v1300
    %v1313 = vmul.f32 %v1301, %v1301
    %v1314 = vmul.f32 %v1302, %v1302
    %v1315 = vmul.f32 %v1303, %v1303
    %v1316 = vmul.f32 %v1304, %v1304
    %v1317 = vmul.f32 %v1305, %v1305
    %1318 = vmatprep.subr.mxu0 %v191
    %1319 = vmatpush1.msra.mxu0 %v190
    %1320 = vmatprep.subr.mxu0 %v193
    %1321 = vmatpush1.msra.mxu0 %v192
    %1322 = vmatprep.subr.mxu0 %v195
    %1323 = vmatpush1.msra.mxu0 %v194
    %1324 = vmatprep.subr.mxu0 %v197
    %1325 = vmatpush1.msra.mxu0 %v196
    %1326 = vmatprep.subr.mxu0 %v199
    %1327 = vmatpush1.msra.mxu0 %v198
    %1328 = vmatprep.subr.mxu0 %v201
    %1329 = vmatpush1.msra.mxu0 %v200
    %1330 = vmatprep.subr.mxu0 %v203
    %1331 = vmatpush1.msra.mxu0 %v202
    %1332 = vmatprep.subr.mxu0 %v205
    %1333 = vmatpush1.msra.mxu0 %v204
    %1334 = vmatprep.subr.mxu0 %v207
    %1335 = vmatpush1.msra.mxu0 %v206
    %1336 = vmatprep.subr.mxu0 %v209
    %1337 = vmatpush1.msra.mxu0 %v208
    %1338 = vmatprep.subr.mxu0 %v211
    %1339 = vmatpush1.msra.mxu0 %v210
    %1340 = vmatprep.subr.mxu0 %v213
    %1341 = vmatpush1.msra.mxu0 %v212
    %1342 = vmatprep.subr.mxu0 %v215
    %1343 = vmatpush1.msra.mxu0 %v214
    %1344 = vmatprep.subr.mxu0 %v217
    %1345 = vmatpush1.msra.mxu0 %v216
    %1346 = vmatprep.subr.mxu0 %v219
    %1347 = vmatpush1.msra.mxu0 %v218
    %1348 = vmatprep.subr.mxu0 %v221
    %1349 = vmatpush1.msra.mxu0 %v220
    %1350 = vmatprep.subr.mxu0 %v223
    %1351 = vmatpush1.msra.mxu0 %v222
    %1352 = vmatprep.subr.mxu0 %v225
    %1353 = vmatpush1.msra.mxu0 %v224
    %1354 = vmatprep.subr.mxu0 %v227
    %1355 = vmatpush1.msra.mxu0 %v226
    %1356 = vmatprep.subr.mxu0 %v229
    %1357 = vmatpush1.msra.mxu0 %v228
    %1358 = vmatprep.subr.mxu0 %v231
    %1359 = vmatpush1.msra.mxu0 %v230
    %1360 = vmatprep.subr.mxu0 %v233
    %1361 = vmatpush1.msra.mxu0 %v232
    %1362 = vmatprep.subr.mxu0 %v235
    %1363 = vmatpush1.msra.mxu0 %v234
    %1364 = vmatprep.subr.mxu0 %v237
    %1365 = vmatpush1.msra.mxu0 %v236
    %1366 = vmatprep.subr.mxu0 %v239
    %1367 = vmatpush1.msra.mxu0 %v238
    %1368 = vmatprep.subr.mxu0 %v241
    %1369 = vmatpush1.msra.mxu0 %v240
    %1370 = vmatprep.subr.mxu0 %v243
    %1371 = vmatpush1.msra.mxu0 %v242
    %1372 = vmatprep.subr.mxu0 %v245
    %1373 = vmatpush1.msra.mxu0 %v244
    %1374 = vmatprep.subr.mxu0 %v247
    %1375 = vmatpush1.msra.mxu0 %v246
    %1376 = vmatprep.subr.mxu0 %v249
    %1377 = vmatpush1.msra.mxu0 %v248
    %1378 = vmatprep.subr.mxu0 %v251
    %1379 = vmatpush1.msra.mxu0 %v250
    %1380 = vmatprep.subr.mxu0 %v253
    %1381 = vmatpush1.msra.mxu0 %v252
    %1382 = vmatprep.mubr.f32.mxu0 %v1307
    %1383 = vmatmul.mubr.f32.gmra.mrb[0].mxu0 %v1306
    %v1384 = vpop.f32.mrb[0].mxu0
    %v1385 = vadd.f32 1e-05, %v1384
    %v1386 = vpop.f32.mrb[0].mxu0
    %v1387 = vadd.f32 1e-05, %v1386
    %1388 = vmatprep.mubr.f32.mxu0 %v1309
    %1389 = vmatmul.mubr.f32.gmra.mrb[0].mxu0 %v1308
    %v1390 = vpop.f32.mrb[0].mxu0
    %v1391 = vadd.f32 1e-05, %v1390
    %v1392 = vpop.f32.mrb[0].mxu0
    %v1393 = vadd.f32 1e-05, %v1392
    %1394 = vmatprep.mubr.f32.mxu0 %v1311
    %1395 = vmatmul.mubr.f32.gmra.mrb[0].mxu0 %v1310
    %v1396 = vpop.f32.mrb[0].mxu0
    %v1397 = vadd.f32 1e-05, %v1396
    %v1398 = vpop.f32.mrb[0].mxu0
    %v1399 = vadd.f32 1e-05, %v1398
    %1400 = vmatprep.mubr.f32.mxu0 %v1313
    %1401 = vmatmul.mubr.f32.gmra.mrb[0].mxu0 %v1312
    %v1402 = vpop.f32.mrb[0].mxu0
    %v1403 = vadd.f32 1e-05, %v1402
    %v1404 = vpop.f32.mrb[0].mxu0
    %v1405 = vadd.f32 1e-05, %v1404
    %1406 = vmatprep.mubr.f32.mxu0 %v1315
    %1407 = vmatmul.mubr.f32.gmra.mrb[0].mxu0 %v1314
    %v1408 = vpop.f32.mrb[0].mxu0
    %v1409 = vadd.f32 1e-05, %v1408
    %v1410 = vpop.f32.mrb[0].mxu0
    %v1411 = vadd.f32 1e-05, %v1410
    %1412 = vmatprep.mubr.f32.mxu0 %v1317
    %1413 = vmatmul.mubr.f32.gmra.mrb[0].mxu0 %v1316
    %v1414 = vpop.f32.mrb[0].mxu0
    %v1415 = vadd.f32 1e-05, %v1414
    %v1416 = vpop.f32.mrb[0].mxu0
    %v1417 = vadd.f32 1e-05, %v1416
    %1418 = vdwg.mxu0
    %v1419 = vrsqrt.pop %v1385
    %v1420 = vrsqrt.pop %v1387
    %v1421 = vrsqrt.pop %v1391
    %v1422 = vrsqrt.pop %v1393
    %v1423 = vrsqrt.pop %v1397
    %v1424 = vrsqrt.pop %v1399
    %v1425 = vrsqrt.pop %v1403
    %v1426 = vrsqrt.pop %v1405
    %v1427 = vrsqrt.pop %v1409
    %v1428 = vrsqrt.pop %v1411
    %v1429 = vrsqrt.pop %v1415
    %v1430 = vrsqrt.pop %v1417
    %v1431 = vmul.f32 %v1294, %v1419
    %v1432 = vmul.f32 %v1295, %v1420
    %v1433 = vmul.f32 %v1296, %v1421
    %v1434 = vmul.f32 %v1297, %v1422
    %v1435 = vmul.f32 %v1298, %v1423
    %v1436 = vmul.f32 %v1299, %v1424
    %v1437 = vmul.f32 %v1300, %v1425
    %v1438 = vmul.f32 %v1301, %v1426
    %v1439 = vmul.f32 %v1302, %v1427
    %v1440 = vmul.f32 %v1303, %v1428
    %v1441 = vmul.f32 %v1304, %v1429
    %v1442 = vmul.f32 %v1305, %v1430
    %v1443 = vmul.f32 %v1431, %v938
    %v1444 = vmul.f32 %v1432, %v939
    %v1445 = vmul.f32 %v1433, %v940
    %v1446 = vmul.f32 %v1434, %v941
    %v1447 = vmul.f32 %v1435, %v942
    %v1448 = vmul.f32 %v1436, %v943
    %v1449 = vmul.f32 %v1437, %v944
    %v1450 = vmul.f32 %v1438, %v945
    %v1451 = vmul.f32 %v1439, %v946
    %v1452 = vmul.f32 %v1440, %v947
    %v1453 = vmul.f32 %v1441, %v948
    %v1454 = vmul.f32 %v1442, %v949
    %v1455 = vadd.f32 %v1443, %v950
    %v1456 = vadd.f32 %v1444, %v951
    %v1457 = vadd.f32 %v1445, %v952
    %v1458 = vadd.f32 %v1446, %v953
    %v1459 = vadd.f32 %v1447, %v954
    %v1460 = vadd.f32 %v1448, %v955
    %v1461 = vadd.f32 %v1449, %v956
    %v1462 = vadd.f32 %v1450, %v957
    %v1463 = vadd.f32 %v1451, %v958
    %v1464 = vadd.f32 %v1452, %v959
    %v1465 = vadd.f32 %v1453, %v960
    %v1466 = vadd.f32 %v1454, %v961
    %v1467 = vtanh.pop %v1455
    %v1468 = vtanh.pop %v1456
    %v1469 = vtanh.pop %v1457
    %v1470 = vtanh.pop %v1458
    %v1471 = vtanh.pop %v1459
    %v1472 = vtanh.pop %v1460
    %v1473 = vtanh.pop %v1461
    %v1474 = vtanh.pop %v1462
    %v1475 = vtanh.pop %v1463
    %v1476 = vtanh.pop %v1464
    %v1477 = vtanh.pop %v1465
    %v1478 = vtanh.pop %v1466
    %v1479 = vadd.f32 %v1467, %v178
    %v1480 = vadd.f32 %v1468, %v179
    %v1481 = vadd.f32 %v1469, %v180
    %v1482 = vadd.f32 %v1470, %v181
    %v1483 = vadd.f32 %v1471, %v182
    %v1484 = vadd.f32 %v1472, %v183
    %v1485 = vadd.f32 %v1473, %v184
    %v1486 = vadd.f32 %v1474, %v185
    %v1487 = vadd.f32 %v1475, %v186
    %v1488 = vadd.f32 %v1476, %v187
    %v1489 = vadd.f32 %v1477, %v188
    %v1490 = vadd.f32 %v1478, %v189
    %1491 = vst [vmem:[#allocation19] sm:$0xff] %v1479
    %1492 = vst [vmem:[#allocation19 + $0x8] sm:$0xff] %v1480
    %1493 = vst [vmem:[#allocation19 + $0x10] sm:$0xff] %v1481
    %1494 = vst [vmem:[#allocation19 + $0x18] sm:$0xff] %v1482
    %1495 = vst [vmem:[#allocation19 + $0x20] sm:$0xff] %v1483
    %1496 = vst [vmem:[#allocation19 + $0x28] sm:$0xff] %v1484
    %1497 = vst [vmem:[#allocation19 + $0x30] sm:$0xff] %v1485
    %1498 = vst [vmem:[#allocation19 + $0x38] sm:$0xff] %v1486
    %1499 = vst [vmem:[#allocation19 + $0x40] sm:$0xff] %v1487
    %1500 = vst [vmem:[#allocation19 + $0x48] sm:$0xff] %v1488
    %1501 = vst [vmem:[#allocation19 + $0x50] sm:$0xff] %v1489
    %1502 = vst [vmem:[#allocation19 + $0x58] sm:$0xff] %v1490
    // Predicated region
    $region90: #{tpu_custom_call.1} parent=1 // pred_check
      _
    $region91: #{tpu_custom_call.1} parent=1 // pred_check_branch
      %1504 = sbr.rel (0) target = $region93
    $region92: #{tpu_custom_call.1} parent=1 // pred_region
      %s1506 = ssub.s32 1536, 1536
      %1507 = vsyncadd [#allocation4], %s1506
      %s1508 = sshll.u32 [#allocation19], 4
      %s1509 = int_to_ptr.vmem [resolvable:$true] %s1508
      %1514 = dma.vmem_to_hbm [thread:$0]  %s1509, 1536, %s12, [#allocation4], 256, 256, 16
    $region93: #{tpu_custom_call.1} parent=1 // pred_fallthru
      _
    // Predicated region
    $region94: #{tpu_custom_call.1} parent=1 // pred_check
      _
    $region95: #{tpu_custom_call.1} parent=1 // pred_check_branch
      %1516 = sbr.rel (0) target = $region97
    $region96: #{tpu_custom_call.1} parent=1 // pred_region
      %1517 = dma.done [#allocation4], 1536
    $region97: #{tpu_custom_call.1} parent=1 // pred_fallthru
      _
    %1518 = vsyncpa [#allocation3], 1
    %1519 = vsyncpa [#allocation6], 1
    %1520 = vsyncpa [#allocation9], 1
    %1521 = vsyncpa [#allocation12], 1
    %1522 = vsyncpa [#allocation15], 1
    %1523 = vsyncpa [#allocation18], 1
    %1524 = vsyncpa [#allocation4], 1

</llo_original>
